<compile_context>
chip_gen: v5e
topology: v5e:2x2
jax: 0.10.0
libtpu: 0.0.40
codegen_flags: <defaults>
</compile_context>

<pallas_src>
import math

import jax
import jax.numpy as jnp
from jax.experimental import pallas as pl
from jax.experimental.pallas import tpu as pltpu


MASK_FILL = -1e9   # matches attn.masked_fill(mask, -1e9) in the reference attention


# ----------------------------- in-kernel helpers -----------------------------

def _layer_norm(x, gamma, beta, eps=1e-6):
    # THP EncoderLayer sub-modules use nn.LayerNorm(d_model, eps=1e-6)
    mean = jnp.mean(x, axis=-1, keepdims=True)
    xc = x - mean
    var = jnp.mean(xc * xc, axis=-1, keepdims=True)
    return xc * jax.lax.rsqrt(var + eps) * gamma + beta


def _gelu(x):
    # TODO(synk): tanh-approx GELU; PyTorch F.gelu defaults to exact erf (~1e-3 diff).
    c = math.sqrt(2.0 / math.pi)
    return 0.5 * x * (1.0 + jnp.tanh(c * (x + 0.044715 * x * x * x)))


# ----------------------------- fused encoder kernel --------------------------

def _encoder_st_kernel(oh_ref, time_ref, npad_ref, keypad_ref,
                       posinv_ref, we_ref, be_ref,
                       wq_ref, wk_ref, wv_ref, wfc_ref, bfc_ref,
                       ln1g_ref, ln1b_ref,
                       w1_ref, b1_ref, w2_ref, b2_ref,
                       ln2g_ref, ln2b_ref,
                       out_ref,
                       act_ref, mask_ref):
    s_idx = pl.program_id(0)       # stream: 0 = enc_out, 1 = enc_temporal, 2 = enc_type
    l_idx = pl.program_id(2)       # layer index (innermost -> activation stays resident)
    npad = npad_ref[...]           # (L, 1)

    # ---- layer 0: build the initial embedding + attention mask in VMEM ----
    @pl.when(l_idx == 0)
    def _init():
        # temporal sinusoidal encoding (sin on even feature idx, cos on odd)
        res = time_ref[...] * posinv_ref[...]                     # (L, D)
        Li, Di = res.shape
        parity = jax.lax.broadcasted_iota(jnp.int32, (Li, Di), 1) % 2
        enc_temp = jnp.where(parity == 0, jnp.sin(res), jnp.cos(res)) * npad
        # one-hot event embedding: Linear + ReLU
        enc_type = jnp.maximum(
            jnp.dot(oh_ref[...], we_ref[...],
                    preferred_element_type=jnp.float32) + be_ref[...], 0.0)
        w_t = jnp.where(s_idx == 2, 0.0, 1.0)     # type-only stream drops temporal part
        w_e = jnp.where(s_idx == 1, 0.0, 1.0)     # temporal-only stream drops type part
        act_ref[...] = w_t * enc_temp + w_e * enc_type
        # attention mask (1.0 == masked): key-pad (one_hot ch0 == 0) OR causal
        Lm = mask_ref.shape[0]
        row = jax.lax.broadcasted_iota(jnp.int32, (Lm, Lm), 0)
        col = jax.lax.broadcasted_iota(jnp.int32, (Lm, Lm), 1)
        causal = (col > row).astype(jnp.float32)
        mask_ref[...] = jnp.maximum(causal, keypad_ref[...])      # broadcast (1,L)

    # ---- one post-LN EncoderLayer on the resident activation ----
    x = act_ref[...]                                  # (L, D) f32
    L, D = x.shape
    H = wq_ref.shape[0]
    xb = x.astype(jnp.bfloat16)
    xh = jnp.broadcast_to(xb, (H, L, D))              # head-batched operand (no slicing)

    # multi-head attention, batched over heads (weights pre-split per head,
    # 1/sqrt(d_k) already folded into wq)
    qt = jnp.einsum('hld,hkd->hlk', xh, wq_ref[...],
                    preferred_element_type=jnp.float32)           # (H, L, d_k)
    kt = jnp.einsum('hld,hkd->hlk', xh, wk_ref[...],
                    preferred_element_type=jnp.float32)           # (H, L, d_k)
    vt = jnp.einsum('hld,hvd->hlv', xh, wv_ref[...],
                    preferred_element_type=jnp.float32)           # (H, L, d_v)
    sc = jnp.einsum('hqk,hmk->hqm',
                    qt.astype(jnp.bfloat16), kt.astype(jnp.bfloat16),
                    preferred_element_type=jnp.float32)           # (H, L, L)
    maskf = mask_ref[...]                                         # (L, L), 1.0 == masked
    sc = sc * (1.0 - maskf)[None] + (MASK_FILL * maskf)[None]     # exact masked_fill(-1e9)
    sc = sc - jnp.max(sc, axis=-1, keepdims=True)
    p = jnp.exp(sc)
    p = p * pl.reciprocal(jnp.sum(p, axis=-1, keepdims=True), approx=True)
    head = jnp.einsum('hqk,hkv->hqv',
                      p.astype(jnp.bfloat16), vt.astype(jnp.bfloat16),
                      preferred_element_type=jnp.float32)         # (H, L, d_v)
    proj = jnp.einsum('hqv,hvd->hqd',
                      head.astype(jnp.bfloat16), wfc_ref[...],
                      preferred_element_type=jnp.float32)         # (H, L, D)
    attn = jnp.sum(proj, axis=0) + bfc_ref[...]                   # fc(concat(heads)) + b

    o = attn + x                                                  # residual
    o = _layer_norm(o, ln1g_ref[...], ln1b_ref[...])              # post-LN
    o = o * npad

    # position-wise FFN (GELU) + residual + post-LN
    h1 = _gelu(jnp.dot(o.astype(jnp.bfloat16), w1_ref[...],
                       preferred_element_type=jnp.float32) + b1_ref[...])
    h2 = jnp.dot(h1.astype(jnp.bfloat16), w2_ref[...],
                 preferred_element_type=jnp.float32) + b2_ref[...] + o
    h2 = _layer_norm(h2, ln2g_ref[...], ln2b_ref[...])
    y = h2 * npad

    act_ref[...] = y                                              # stays resident in VMEM

    @pl.when(l_idx == pl.num_programs(2) - 1)
    def _finalize():
        out_ref[...] = y


def encoder_st_call(packed, one_hot, time3, non_pad_mask, keypad_row):
    B, L, loc_dim = one_hot.shape
    D = packed["emb_w"].shape[1]
    n_layers = packed["n_layers"]
    n_head, d_k, d_v = packed["n_head"], packed["d_k"], packed["d_v"]
    d_inner = packed["w1"].shape[2]

    bmap = lambda s, b, l: (b, 0, 0)                       # per-batch inputs
    cmap = lambda s, b, l: (0, 0)                          # broadcast inputs
    wmap3 = lambda s, b, l: (s * n_layers + l, 0, 0)       # stacked rank-3 weights
    wmap4 = lambda s, b, l: (s * n_layers + l, 0, 0, 0)    # stacked rank-4 weights
    seq = lambda d: pl.BlockSpec((None, L, d), bmap)

    return pl.pallas_call(
        _encoder_st_kernel,
        grid=(3, B, n_layers),
        in_specs=[
            seq(loc_dim),                                   # one_hot
            seq(1),                                         # event_time
            seq(1),                                         # non_pad_mask
            pl.BlockSpec((None, 1, L), bmap),               # key-pad row (over keys)
            pl.BlockSpec((1, D), cmap),                     # 1 / position_vec
            pl.BlockSpec((loc_dim, D), cmap),               # emb_w
            pl.BlockSpec((1, D), cmap),                     # emb_b
            pl.BlockSpec((None, n_head, d_k, D), wmap4),    # wq (scaled, per-head)
            pl.BlockSpec((None, n_head, d_k, D), wmap4),    # wk
            pl.BlockSpec((None, n_head, d_v, D), wmap4),    # wv
            pl.BlockSpec((None, n_head, d_v, D), wmap4),    # wfc
            pl.BlockSpec((None, 1, D), wmap3),              # bfc
            pl.BlockSpec((None, 1, D), wmap3),              # ln1 gamma
            pl.BlockSpec((None, 1, D), wmap3),              # ln1 beta
            pl.BlockSpec((None, D, d_inner), wmap3),        # ffn w1
            pl.BlockSpec((None, 1, d_inner), wmap3),        # ffn b1
            pl.BlockSpec((None, d_inner, D), wmap3),        # ffn w2
            pl.BlockSpec((None, 1, D), wmap3),              # ffn b2
            pl.BlockSpec((None, 1, D), wmap3),              # ln2 gamma
            pl.BlockSpec((None, 1, D), wmap3),              # ln2 beta
        ],
        out_specs=pl.BlockSpec((None, None, L, D), lambda s, b, l: (s, b, 0, 0)),
        out_shape=jax.ShapeDtypeStruct((3, B, L, D), jnp.float32),
        scratch_shapes=[pltpu.VMEM((L, D), jnp.float32),    # resident activation
                        pltpu.VMEM((L, L), jnp.float32)],   # resident attention mask
        compiler_params=pltpu.CompilerParams(
            dimension_semantics=("parallel", "parallel", "arbitrary"),
            vmem_limit_bytes=32 * 1024 * 1024),
    )(one_hot, time3, non_pad_mask, keypad_row,
      packed["pos_inv"], packed["emb_w"], packed["emb_b"],
      packed["wq"], packed["wk"], packed["wv"], packed["wfc"], packed["bfc"],
      packed["ln1g"], packed["ln1b"],
      packed["w1"], packed["b1"], packed["w2"], packed["b2"],
      packed["ln2g"], packed["ln2b"])


# ----------------------------- parameters ------------------------------------

def _linear(key, fan_in, fan_out, with_bias=True):
    kw, kb = jax.random.split(key)
    bound = 1.0 / math.sqrt(fan_in)
    w = jax.random.uniform(kw, (fan_in, fan_out), jnp.float32, -bound, bound)
    if not with_bias:
        return w
    b = jax.random.uniform(kb, (1, fan_out), jnp.float32, -bound, bound)
    return w, b


def init_layer_params(key, d_model, d_inner, n_head, d_k, d_v):
    ks = jax.random.split(key, 6)
    wq = _linear(ks[0], d_model, n_head * d_k, with_bias=False)
    wk = _linear(ks[1], d_model, n_head * d_k, with_bias=False)
    wv = _linear(ks[2], d_model, n_head * d_v, with_bias=False)
    wfc, bfc = _linear(ks[3], n_head * d_v, d_model)
    w1, b1 = _linear(ks[4], d_model, d_inner)
    w2, b2 = _linear(ks[5], d_inner, d_model)
    ones = jnp.ones((1, d_model), jnp.float32)
    zeros = jnp.zeros((1, d_model), jnp.float32)
    return dict(wq=wq, wk=wk, wv=wv, wfc=wfc, bfc=bfc,
                ln1g=ones, ln1b=zeros,
                w1=w1, b1=b1, w2=w2, b2=b2,
                ln2g=ones, ln2b=zeros)


def init_params(key, d_model, d_inner, n_layers, n_head, d_k, d_v, loc_dim):
    keys = jax.random.split(key, 3 * n_layers + 1)
    emb_w, emb_b = _linear(keys[0], loc_dim, d_model)
    pos_vec = jnp.array(
        [[math.pow(10000.0, 2.0 * (i // 2) / d_model) for i in range(d_model)]],
        dtype=jnp.float32)                                       # (1, d_model)
    mk = lambda k: init_layer_params(k, d_model, d_inner, n_head, d_k, d_v)
    return dict(
        pos_vec=pos_vec, emb_w=emb_w, emb_b=emb_b,
        layers=[mk(keys[1 + i]) for i in range(n_layers)],
        layers_loc=[mk(keys[1 + n_layers + i]) for i in range(n_layers)],
        layers_temporal=[mk(keys[1 + 2 * n_layers + i]) for i in range(n_layers)],
    )


def pack_params(params, n_layers, n_head, d_k, d_v, mm_dtype=jnp.bfloat16):
    """Stack the 3 stacks x n_layers params for the fused kernel (bf16 matmul weights)."""
    d_model = params["emb_w"].shape[1]
    # stream order: 0 -> enc_output (layer_stack), 1 -> enc_temporal, 2 -> enc_type (loc)
    flat = params["layers"] + params["layers_temporal"] + params["layers_loc"]

    def split_in(w, dh):   # (D, H*dh) -> (H, dh, D)
        return jnp.transpose(w, (1, 0)).reshape(n_head, dh, d_model)

    def split_out(w, dh):  # (H*dh, D) -> (H, dh, D)
        return w.reshape(n_head, dh, d_model)

    scale = 1.0 / math.sqrt(d_k)          # attention temperature folded into Wq
    st = lambda xs: jnp.stack(xs, axis=0)
    return dict(
        n_layers=n_layers, n_head=n_head, d_k=d_k, d_v=d_v,
        pos_inv=(1.0 / params["pos_vec"]).astype(jnp.float32),
        emb_w=params["emb_w"], emb_b=params["emb_b"],
        wq=st([split_in(lp["wq"] * scale, d_k) for lp in flat]).astype(mm_dtype),
        wk=st([split_in(lp["wk"], d_k) for lp in flat]).astype(mm_dtype),
        wv=st([split_in(lp["wv"], d_v) for lp in flat]).astype(mm_dtype),
        wfc=st([split_out(lp["wfc"], d_v) for lp in flat]).astype(mm_dtype),
        bfc=st([lp["bfc"] for lp in flat]),
        ln1g=st([lp["ln1g"] for lp in flat]),
        ln1b=st([lp["ln1b"] for lp in flat]),
        w1=st([lp["w1"] for lp in flat]).astype(mm_dtype),
        b1=st([lp["b1"] for lp in flat]),
        w2=st([lp["w2"] for lp in flat]).astype(mm_dtype),
        b2=st([lp["b2"] for lp in flat]),
        ln2g=st([lp["ln2g"] for lp in flat]),
        ln2b=st([lp["ln2b"] for lp in flat]),
    )


# ----------------------------- forward ---------------------------------------

def encoder_st_forward(packed, event_loc, event_time, non_pad_mask, loc_dim):
    one_hot = jax.nn.one_hot(event_loc[..., 0].astype(jnp.int32), loc_dim,
                             dtype=jnp.float32)                      # [B, L, loc_dim]
    # key-pad mask: Constants.PAD == 0; the reference slices channel 0 of the
    # expanded one-hot pad mask -> key j is masked iff one_hot[b, j, 0] == 0.
    keypad_row = (one_hot[:, :, 0] == 0.0).astype(jnp.float32)[:, None, :]  # [B, 1, L]
    time3 = event_time[..., None]                                    # [B, L, 1]
    out = encoder_st_call(packed, one_hot, time3, non_pad_mask, keypad_row)
    # stream 0 = enc_output, 1 = enc_output_temporal, 2 = enc_output_type
    return out[0], out[1], out[2]


# ----------------------------- main -------------------------------------------

if __name__ == "__main__":
    B, L = 2, 8
    d_model, d_inner = 32, 64
    n_head, d_k, d_v = 4, 8, 8
    n_layers, loc_dim = 2, 4

    key = jax.random.PRNGKey(0)
    kp, k1, k2 = jax.random.split(key, 3)
    raw = init_params(kp, d_model, d_inner, n_layers, n_head, d_k, d_v, loc_dim)
    packed = pack_params(raw, n_layers, n_head, d_k, d_v)

    event_loc = jax.random.randint(k1, (B, L, 1), 0, loc_dim, dtype=jnp.int32)
    event_time = jnp.cumsum(
        jax.random.uniform(k2, (B, L), jnp.float32, 0.1, 1.0), axis=1)
    lengths = jnp.array([L, L - 2])
    non_pad_mask = (jnp.arange(L)[None, :] < lengths[:, None]
                    ).astype(jnp.float32)[..., None]                 # [B, L, 1]

    enc_out, enc_temporal, enc_type = encoder_st_forward(
        packed, event_loc, event_time, non_pad_mask, loc_dim)
    jax.block_until_ready((enc_out, enc_temporal, enc_type))

    assert enc_out.shape == (B, L, d_model)
    assert enc_temporal.shape == (B, L, d_model)
    assert enc_type.shape == (B, L, d_model)
    assert bool(jnp.all(jnp.isfinite(enc_out)))
    assert bool(jnp.all(jnp.isfinite(enc_temporal)))
    assert bool(jnp.all(jnp.isfinite(enc_type)))
    print("KERNEL_OK")
</pallas_src>

<mosaic_0001>
module attributes {stable_mosaic.version = 11 : i64} {
  func.func @_encoder_st_kernel(%arg0: i32, %arg1: i32, %arg2: i32, %arg3: memref<1x8x4xf32, #tpu.memory_space<vmem>>, %arg4: memref<1x8x1xf32, #tpu.memory_space<vmem>>, %arg5: memref<1x8x1xf32, #tpu.memory_space<vmem>>, %arg6: memref<1x1x8xf32, #tpu.memory_space<vmem>>, %arg7: memref<1x32xf32, #tpu.memory_space<vmem>>, %arg8: memref<4x32xf32, #tpu.memory_space<vmem>>, %arg9: memref<1x32xf32, #tpu.memory_space<vmem>>, %arg10: memref<1x4x8x32xbf16, #tpu.memory_space<vmem>>, %arg11: memref<1x4x8x32xbf16, #tpu.memory_space<vmem>>, %arg12: memref<1x4x8x32xbf16, #tpu.memory_space<vmem>>, %arg13: memref<1x4x8x32xbf16, #tpu.memory_space<vmem>>, %arg14: memref<1x1x32xf32, #tpu.memory_space<vmem>>, %arg15: memref<1x1x32xf32, #tpu.memory_space<vmem>>, %arg16: memref<1x1x32xf32, #tpu.memory_space<vmem>>, %arg17: memref<1x32x64xbf16, #tpu.memory_space<vmem>>, %arg18: memref<1x1x64xf32, #tpu.memory_space<vmem>>, %arg19: memref<1x64x32xbf16, #tpu.memory_space<vmem>>, %arg20: memref<1x1x32xf32, #tpu.memory_space<vmem>>, %arg21: memref<1x1x32xf32, #tpu.memory_space<vmem>>, %arg22: memref<1x1x32xf32, #tpu.memory_space<vmem>>, %arg23: memref<1x1x8x32xf32, #tpu.memory_space<vmem>>, %arg24: memref<8x32xf32, #tpu.memory_space<vmem>>, %arg25: memref<8x8xf32, #tpu.memory_space<vmem>>) attributes {dimension_semantics = [#tpu.dimension_semantics<parallel>, #tpu.dimension_semantics<parallel>, #tpu.dimension_semantics<arbitrary>], iteration_bounds = array<i64: 3, 2, 2>, scalar_prefetch = 0 : i64, scratch_operands = 2 : i64, tpu.core_type = #tpu.core_type<tc>, window_params = [{transform_indices = @transform_0, window_bounds = array<i64: 1, 8, 4>}, {transform_indices = @transform_1, window_bounds = array<i64: 1, 8, 1>}, {transform_indices = @transform_2, window_bounds = array<i64: 1, 8, 1>}, {transform_indices = @transform_3, window_bounds = array<i64: 1, 1, 8>}, {pipeline_mode = #tpu.pipeline_mode<synchronous>, transform_indices = @transform_4, window_bounds = array<i64: 1, 32>}, {pipeline_mode = #tpu.pipeline_mode<synchronous>, transform_indices = @transform_5, window_bounds = array<i64: 4, 32>}, {pipeline_mode = #tpu.pipeline_mode<synchronous>, transform_indices = @transform_6, window_bounds = array<i64: 1, 32>}, {transform_indices = @transform_7, window_bounds = array<i64: 1, 4, 8, 32>}, {transform_indices = @transform_8, window_bounds = array<i64: 1, 4, 8, 32>}, {transform_indices = @transform_9, window_bounds = array<i64: 1, 4, 8, 32>}, {transform_indices = @transform_10, window_bounds = array<i64: 1, 4, 8, 32>}, {transform_indices = @transform_11, window_bounds = array<i64: 1, 1, 32>}, {transform_indices = @transform_12, window_bounds = array<i64: 1, 1, 32>}, {transform_indices = @transform_13, window_bounds = array<i64: 1, 1, 32>}, {transform_indices = @transform_14, window_bounds = array<i64: 1, 32, 64>}, {transform_indices = @transform_15, window_bounds = array<i64: 1, 1, 64>}, {transform_indices = @transform_16, window_bounds = array<i64: 1, 64, 32>}, {transform_indices = @transform_17, window_bounds = array<i64: 1, 1, 32>}, {transform_indices = @transform_18, window_bounds = array<i64: 1, 1, 32>}, {transform_indices = @transform_19, window_bounds = array<i64: 1, 1, 32>}, {transform_indices = @transform_20, window_bounds = array<i64: 1, 1, 8, 32>}]} {
    %c0 = arith.constant 0 : index
    %c0_0 = arith.constant 0 : index
    %c0_1 = arith.constant 0 : index
    %0 = vector.load %arg5[%c0, %c0_0, %c0_1] : memref<1x8x1xf32, #tpu.memory_space<vmem>>, vector<1x8x1xf32>
    %1 = vector.shape_cast %0 : vector<1x8x1xf32> to vector<8x1xf32>
    %c0_i32 = arith.constant 0 : i32
    %2 = arith.cmpi eq, %arg2, %c0_i32 : i32
    %3 = arith.extui %2 : i1 to i32
    %c0_i32_2 = arith.constant 0 : i32
    %4 = arith.cmpi ne, %3, %c0_i32_2 : i32
    scf.if %4 {
      %c0_79 = arith.constant 0 : index
      %c0_80 = arith.constant 0 : index
      %c0_81 = arith.constant 0 : index
      %141 = vector.load %arg4[%c0_79, %c0_80, %c0_81] : memref<1x8x1xf32, #tpu.memory_space<vmem>>, vector<1x8x1xf32>
      %142 = vector.shape_cast %141 : vector<1x8x1xf32> to vector<8x1xf32>
      %c0_82 = arith.constant 0 : index
      %c0_83 = arith.constant 0 : index
      %143 = vector.load %arg7[%c0_82, %c0_83] : memref<1x32xf32, #tpu.memory_space<vmem>>, vector<1x32xf32>
      %144 = vector.broadcast %142 : vector<8x1xf32> to vector<8x32xf32>
      %145 = vector.broadcast %143 : vector<1x32xf32> to vector<8x32xf32>
      %146 = arith.mulf %144, %145 : vector<8x32xf32>
      %147 = tpu.iota {dimensions = array<i32: 1>} : vector<8x32xi32>
      %c2_i32 = arith.constant 2 : i32
      %c0_i32_84 = arith.constant 0 : i32
      %148 = arith.cmpi eq, %c2_i32, %c0_i32_84 : i32
      %c1_i32_85 = arith.constant 1 : i32
      %149 = arith.select %148, %c1_i32_85, %c2_i32 : i32
      %150 = vector.broadcast %149 : i32 to vector<8x32xi32>
      %151 = arith.remsi %147, %150 : vector<8x32xi32>
      %c0_i32_86 = arith.constant 0 : i32
      %152 = vector.broadcast %c0_i32_86 : i32 to vector<8x32xi32>
      %153 = arith.cmpi ne, %151, %152 : vector<8x32xi32>
      %c0_i32_87 = arith.constant 0 : i32
      %154 = vector.broadcast %c0_i32_87 : i32 to vector<8x32xi32>
      %155 = arith.cmpi slt, %151, %154 : vector<8x32xi32>
      %c0_i32_88 = arith.constant 0 : i32
      %156 = arith.cmpi slt, %149, %c0_i32_88 : i32
      %157 = vector.broadcast %156 : i1 to vector<8x32xi1>
      %158 = vector.broadcast %157 : vector<8x32xi1> to vector<8x32xi1>
      %159 = arith.xori %155, %158 : vector<8x32xi1>
      %160 = arith.andi %159, %153 : vector<8x32xi1>
      %161 = vector.broadcast %149 : i32 to vector<8x32xi32>
      %162 = arith.addi %151, %161 : vector<8x32xi32>
      %163 = arith.select %160, %162, %151 : vector<8x32xi1>, vector<8x32xi32>
      %c0_i32_89 = arith.constant 0 : i32
      %164 = vector.broadcast %c0_i32_89 : i32 to vector<8x32xi32>
      %165 = arith.cmpi eq, %163, %164 : vector<8x32xi32>
      %166 = math.sin %146 : vector<8x32xf32>
      %167 = math.cos %146 : vector<8x32xf32>
      %168 = arith.select %165, %166, %167 : vector<8x32xi1>, vector<8x32xf32>
      %169 = vector.broadcast %1 : vector<8x1xf32> to vector<8x32xf32>
      %170 = arith.mulf %168, %169 : vector<8x32xf32>
      %c0_90 = arith.constant 0 : index
      %c0_91 = arith.constant 0 : index
      %c0_92 = arith.constant 0 : index
      %171 = vector.load %arg3[%c0_90, %c0_91, %c0_92] : memref<1x8x4xf32, #tpu.memory_space<vmem>>, vector<1x8x4xf32>
      %172 = vector.shape_cast %171 : vector<1x8x4xf32> to vector<8x4xf32>
      %c0_93 = arith.constant 0 : index
      %c0_94 = arith.constant 0 : index
      %173 = vector.load %arg8[%c0_93, %c0_94] : memref<4x32xf32, #tpu.memory_space<vmem>>, vector<4x32xf32>
      %cst_95 = arith.constant dense<0.000000e+00> : vector<8x32xf32>
      %174 = tpu.matmul %172, %173, %cst_95 {dimension_numbers = #tpu.dot_dimension_numbers<[1], [0], [0], [1], [0, 0, 1, 1], [], []>} : vector<8x4xf32>, vector<4x32xf32>, vector<8x32xf32> -> vector<8x32xf32>
      %c0_96 = arith.constant 0 : index
      %c0_97 = arith.constant 0 : index
      %175 = vector.load %arg9[%c0_96, %c0_97] : memref<1x32xf32, #tpu.memory_space<vmem>>, vector<1x32xf32>
      %176 = vector.broadcast %175 : vector<1x32xf32> to vector<8x32xf32>
      %177 = arith.addf %174, %176 : vector<8x32xf32>
      %cst_98 = arith.constant 0.000000e+00 : f32
      %178 = vector.broadcast %cst_98 : f32 to vector<8x32xf32>
      %179 = arith.maximumf %177, %178 : vector<8x32xf32>
      %c2_i32_99 = arith.constant 2 : i32
      %180 = arith.cmpi eq, %arg0, %c2_i32_99 : i32
      %cst_100 = arith.constant 0.000000e+00 : f32
      %cst_101 = arith.constant 1.000000e+00 : f32
      %181 = arith.select %180, %cst_100, %cst_101 : f32
      %c1_i32_102 = arith.constant 1 : i32
      %182 = arith.cmpi eq, %arg0, %c1_i32_102 : i32
      %cst_103 = arith.constant 0.000000e+00 : f32
      %cst_104 = arith.constant 1.000000e+00 : f32
      %183 = arith.select %182, %cst_103, %cst_104 : f32
      %184 = vector.broadcast %181 : f32 to vector<8x32xf32>
      %185 = arith.mulf %184, %170 : vector<8x32xf32>
      %186 = vector.broadcast %183 : f32 to vector<8x32xf32>
      %187 = arith.mulf %186, %179 : vector<8x32xf32>
      %188 = arith.addf %185, %187 : vector<8x32xf32>
      %c0_105 = arith.constant 0 : index
      %c0_106 = arith.constant 0 : index
      %189 = vector.load %arg24[%c0_105, %c0_106] : memref<8x32xf32, #tpu.memory_space<vmem>>, vector<8x32xf32>
      tpu.vector_store %arg24[%c0_105, %c0_106], %188 {strides = array<i32>} : memref<8x32xf32, #tpu.memory_space<vmem>>, vector<8x32xf32>,
      %190 = tpu.iota {dimensions = array<i32: 0>} : vector<8x8xi32>
      %191 = tpu.iota {dimensions = array<i32: 1>} : vector<8x8xi32>
      %192 = arith.cmpi sgt, %191, %190 : vector<8x8xi32>
      %193 = arith.extui %192 : vector<8x8xi1> to vector<8x8xi32>
      %194 = arith.sitofp %193 : vector<8x8xi32> to vector<8x8xf32>
      %c0_107 = arith.constant 0 : index
      %c0_108 = arith.constant 0 : index
      %c0_109 = arith.constant 0 : index
      %195 = vector.load %arg6[%c0_107, %c0_108, %c0_109] : memref<1x1x8xf32, #tpu.memory_space<vmem>>, vector<1x1x8xf32>
      %196 = vector.shape_cast %195 : vector<1x1x8xf32> to vector<1x8xf32>
      %197 = vector.broadcast %196 : vector<1x8xf32> to vector<8x8xf32>
      %198 = arith.maximumf %194, %197 : vector<8x8xf32>
      %c0_110 = arith.constant 0 : index
      %c0_111 = arith.constant 0 : index
      %199 = vector.load %arg25[%c0_110, %c0_111] : memref<8x8xf32, #tpu.memory_space<vmem>>, vector<8x8xf32>
      tpu.vector_store %arg25[%c0_110, %c0_111], %198 {strides = array<i32>} : memref<8x8xf32, #tpu.memory_space<vmem>>, vector<8x8xf32>,
    } else {
    }
    %c0_3 = arith.constant 0 : index
    %c0_4 = arith.constant 0 : index
    %5 = vector.load %arg24[%c0_3, %c0_4] : memref<8x32xf32, #tpu.memory_space<vmem>>, vector<8x32xf32>
    %6 = arith.truncf %5 : vector<8x32xf32> to vector<8x32xbf16>
    %7 = vector.shape_cast %6 : vector<8x32xbf16> to vector<1x8x32xbf16>
    %8 = vector.broadcast %7 : vector<1x8x32xbf16> to vector<4x8x32xbf16>
    %c0_5 = arith.constant 0 : index
    %c0_6 = arith.constant 0 : index
    %c0_7 = arith.constant 0 : index
    %c0_8 = arith.constant 0 : index
    %9 = vector.load %arg10[%c0_5, %c0_6, %c0_7, %c0_8] : memref<1x4x8x32xbf16, #tpu.memory_space<vmem>>, vector<1x4x8x32xbf16>
    %10 = vector.shape_cast %9 : vector<1x4x8x32xbf16> to vector<4x8x32xbf16>
    "tpu.trace_start"() <{level = 10 : i32, message = "hld,hkd->hlk"}> : () -> ()
    %cst = arith.constant dense<0.000000e+00> : vector<4x8x8xf32>
    %11 = tpu.matmul %8, %10, %cst {dimension_numbers = #tpu.dot_dimension_numbers<[2], [2], [1], [1], [0, 0, 0, 1, 1, 1], [0], [0]>} : vector<4x8x32xbf16>, vector<4x8x32xbf16>, vector<4x8x8xf32> -> vector<4x8x8xf32>
    "tpu.trace_stop"() : () -> ()
    %c0_9 = arith.constant 0 : index
    %c0_10 = arith.constant 0 : index
    %c0_11 = arith.constant 0 : index
    %c0_12 = arith.constant 0 : index
    %12 = vector.load %arg11[%c0_9, %c0_10, %c0_11, %c0_12] : memref<1x4x8x32xbf16, #tpu.memory_space<vmem>>, vector<1x4x8x32xbf16>
    %13 = vector.shape_cast %12 : vector<1x4x8x32xbf16> to vector<4x8x32xbf16>
    "tpu.trace_start"() <{level = 10 : i32, message = "hld,hkd->hlk"}> : () -> ()
    %cst_13 = arith.constant dense<0.000000e+00> : vector<4x8x8xf32>
    %14 = tpu.matmul %8, %13, %cst_13 {dimension_numbers = #tpu.dot_dimension_numbers<[2], [2], [1], [1], [0, 0, 0, 1, 1, 1], [0], [0]>} : vector<4x8x32xbf16>, vector<4x8x32xbf16>, vector<4x8x8xf32> -> vector<4x8x8xf32>
    "tpu.trace_stop"() : () -> ()
    %c0_14 = arith.constant 0 : index
    %c0_15 = arith.constant 0 : index
    %c0_16 = arith.constant 0 : index
    %c0_17 = arith.constant 0 : index
    %15 = vector.load %arg12[%c0_14, %c0_15, %c0_16, %c0_17] : memref<1x4x8x32xbf16, #tpu.memory_space<vmem>>, vector<1x4x8x32xbf16>
    %16 = vector.shape_cast %15 : vector<1x4x8x32xbf16> to vector<4x8x32xbf16>
    "tpu.trace_start"() <{level = 10 : i32, message = "hld,hvd->hlv"}> : () -> ()
    %cst_18 = arith.constant dense<0.000000e+00> : vector<4x8x8xf32>
    %17 = tpu.matmul %8, %16, %cst_18 {dimension_numbers = #tpu.dot_dimension_numbers<[2], [2], [1], [1], [0, 0, 0, 1, 1, 1], [0], [0]>} : vector<4x8x32xbf16>, vector<4x8x32xbf16>, vector<4x8x8xf32> -> vector<4x8x8xf32>
    "tpu.trace_stop"() : () -> ()
    %18 = arith.truncf %11 : vector<4x8x8xf32> to vector<4x8x8xbf16>
    %19 = arith.truncf %14 : vector<4x8x8xf32> to vector<4x8x8xbf16>
    "tpu.trace_start"() <{level = 10 : i32, message = "hqk,hmk->hqm"}> : () -> ()
    %cst_19 = arith.constant dense<0.000000e+00> : vector<4x8x8xf32>
    %20 = tpu.matmul %18, %19, %cst_19 {dimension_numbers = #tpu.dot_dimension_numbers<[2], [2], [1], [1], [0, 0, 0, 1, 1, 1], [0], [0]>} : vector<4x8x8xbf16>, vector<4x8x8xbf16>, vector<4x8x8xf32> -> vector<4x8x8xf32>
    "tpu.trace_stop"() : () -> ()
    %c0_20 = arith.constant 0 : index
    %c0_21 = arith.constant 0 : index
    %21 = vector.load %arg25[%c0_20, %c0_21] : memref<8x8xf32, #tpu.memory_space<vmem>>, vector<8x8xf32>
    %cst_22 = arith.constant 1.000000e+00 : f32
    %22 = vector.broadcast %cst_22 : f32 to vector<8x8xf32>
    %23 = arith.subf %22, %21 : vector<8x8xf32>
    %24 = vector.shape_cast %23 : vector<8x8xf32> to vector<1x8x8xf32>
    %25 = vector.broadcast %24 : vector<1x8x8xf32> to vector<4x8x8xf32>
    %26 = arith.mulf %20, %25 : vector<4x8x8xf32>
    %cst_23 = arith.constant -1.000000e+09 : f32
    %27 = vector.broadcast %cst_23 : f32 to vector<8x8xf32>
    %28 = arith.mulf %27, %21 : vector<8x8xf32>
    %29 = vector.shape_cast %28 : vector<8x8xf32> to vector<1x8x8xf32>
    %30 = vector.broadcast %29 : vector<1x8x8xf32> to vector<4x8x8xf32>
    %31 = arith.addf %26, %30 : vector<4x8x8xf32>
    %cst_24 = arith.constant dense<0xFF800000> : vector<4x8xf32>
    %32 = vector.multi_reduction <maximumf>, %31, %cst_24 [2] : vector<4x8x8xf32> to vector<4x8xf32>
    %33 = vector.shape_cast %32 : vector<4x8xf32> to vector<4x8x1xf32>
    %34 = vector.broadcast %33 : vector<4x8x1xf32> to vector<4x8x8xf32>
    %35 = arith.subf %31, %34 : vector<4x8x8xf32>
    %36 = math.exp %35 : vector<4x8x8xf32>
    %cst_25 = arith.constant dense<0.000000e+00> : vector<4x8xf32>
    %37 = vector.multi_reduction <add>, %36, %cst_25 [2] : vector<4x8x8xf32> to vector<4x8xf32>
    %38 = vector.shape_cast %37 : vector<4x8xf32> to vector<4x8x1xf32>
    %39 = tpu.reciprocal %38 {approx = true} : vector<4x8x1xf32> -> vector<4x8x1xf32>
    %40 = vector.broadcast %39 : vector<4x8x1xf32> to vector<4x8x8xf32>
    %41 = arith.mulf %36, %40 : vector<4x8x8xf32>
    %42 = arith.truncf %41 : vector<4x8x8xf32> to vector<4x8x8xbf16>
    %43 = arith.truncf %17 : vector<4x8x8xf32> to vector<4x8x8xbf16>
    "tpu.trace_start"() <{level = 10 : i32, message = "hqk,hkv->hqv"}> : () -> ()
    %cst_26 = arith.constant dense<0.000000e+00> : vector<4x8x8xf32>
    %44 = tpu.matmul %42, %43, %cst_26 {dimension_numbers = #tpu.dot_dimension_numbers<[2], [1], [1], [2], [0, 0, 0, 1, 1, 2], [0], [0]>} : vector<4x8x8xbf16>, vector<4x8x8xbf16>, vector<4x8x8xf32> -> vector<4x8x8xf32>
    "tpu.trace_stop"() : () -> ()
    %45 = arith.truncf %44 : vector<4x8x8xf32> to vector<4x8x8xbf16>
    %c0_27 = arith.constant 0 : index
    %c0_28 = arith.constant 0 : index
    %c0_29 = arith.constant 0 : index
    %c0_30 = arith.constant 0 : index
    %46 = vector.load %arg13[%c0_27, %c0_28, %c0_29, %c0_30] : memref<1x4x8x32xbf16, #tpu.memory_space<vmem>>, vector<1x4x8x32xbf16>
    %47 = vector.shape_cast %46 : vector<1x4x8x32xbf16> to vector<4x8x32xbf16>
    "tpu.trace_start"() <{level = 10 : i32, message = "hqv,hvd->hqd"}> : () -> ()
    %cst_31 = arith.constant dense<0.000000e+00> : vector<4x8x32xf32>
    %48 = tpu.matmul %45, %47, %cst_31 {dimension_numbers = #tpu.dot_dimension_numbers<[2], [1], [1], [2], [0, 0, 0, 1, 1, 2], [0], [0]>} : vector<4x8x8xbf16>, vector<4x8x32xbf16>, vector<4x8x32xf32> -> vector<4x8x32xf32>
    "tpu.trace_stop"() : () -> ()
    %cst_32 = arith.constant dense<0.000000e+00> : vector<8x32xf32>
    %49 = vector.multi_reduction <add>, %48, %cst_32 [0] : vector<4x8x32xf32> to vector<8x32xf32>
    %c0_33 = arith.constant 0 : index
    %c0_34 = arith.constant 0 : index
    %c0_35 = arith.constant 0 : index
    %50 = vector.load %arg14[%c0_33, %c0_34, %c0_35] : memref<1x1x32xf32, #tpu.memory_space<vmem>>, vector<1x1x32xf32>
    %51 = vector.shape_cast %50 : vector<1x1x32xf32> to vector<1x32xf32>
    %52 = vector.broadcast %51 : vector<1x32xf32> to vector<8x32xf32>
    %53 = arith.addf %49, %52 : vector<8x32xf32>
    %54 = arith.addf %53, %5 : vector<8x32xf32>
    %c0_36 = arith.constant 0 : index
    %c0_37 = arith.constant 0 : index
    %c0_38 = arith.constant 0 : index
    %55 = vector.load %arg15[%c0_36, %c0_37, %c0_38] : memref<1x1x32xf32, #tpu.memory_space<vmem>>, vector<1x1x32xf32>
    %56 = vector.shape_cast %55 : vector<1x1x32xf32> to vector<1x32xf32>
    %c0_39 = arith.constant 0 : index
    %c0_40 = arith.constant 0 : index
    %c0_41 = arith.constant 0 : index
    %57 = vector.load %arg16[%c0_39, %c0_40, %c0_41] : memref<1x1x32xf32, #tpu.memory_space<vmem>>, vector<1x1x32xf32>
    %58 = vector.shape_cast %57 : vector<1x1x32xf32> to vector<1x32xf32>
    %cst_42 = arith.constant dense<0.000000e+00> : vector<8xf32>
    %59 = vector.multi_reduction <add>, %54, %cst_42 [1] : vector<8x32xf32> to vector<8xf32>
    %60 = vector.shape_cast %59 : vector<8xf32> to vector<8x1xf32>
    %cst_43 = arith.constant 3.200000e+01 : f32
    %61 = vector.broadcast %cst_43 : f32 to vector<8x1xf32>
    %62 = arith.divf %60, %61 : vector<8x1xf32>
    %63 = vector.broadcast %62 : vector<8x1xf32> to vector<8x32xf32>
    %64 = arith.subf %54, %63 : vector<8x32xf32>
    %65 = arith.mulf %64, %64 : vector<8x32xf32>
    %cst_44 = arith.constant dense<0.000000e+00> : vector<8xf32>
    %66 = vector.multi_reduction <add>, %65, %cst_44 [1] : vector<8x32xf32> to vector<8xf32>
    %67 = vector.shape_cast %66 : vector<8xf32> to vector<8x1xf32>
    %cst_45 = arith.constant 3.200000e+01 : f32
    %68 = vector.broadcast %cst_45 : f32 to vector<8x1xf32>
    %69 = arith.divf %67, %68 : vector<8x1xf32>
    %cst_46 = arith.constant 9.99999997E-7 : f32
    %70 = vector.broadcast %cst_46 : f32 to vector<8x1xf32>
    %71 = arith.addf %69, %70 : vector<8x1xf32>
    %72 = math.rsqrt %71 : vector<8x1xf32>
    %73 = vector.broadcast %72 : vector<8x1xf32> to vector<8x32xf32>
    %74 = arith.mulf %64, %73 : vector<8x32xf32>
    %75 = vector.broadcast %56 : vector<1x32xf32> to vector<8x32xf32>
    %76 = arith.mulf %74, %75 : vector<8x32xf32>
    %77 = vector.broadcast %58 : vector<1x32xf32> to vector<8x32xf32>
    %78 = arith.addf %76, %77 : vector<8x32xf32>
    %79 = vector.broadcast %1 : vector<8x1xf32> to vector<8x32xf32>
    %80 = arith.mulf %78, %79 : vector<8x32xf32>
    %81 = arith.truncf %80 : vector<8x32xf32> to vector<8x32xbf16>
    %c0_47 = arith.constant 0 : index
    %c0_48 = arith.constant 0 : index
    %c0_49 = arith.constant 0 : index
    %82 = vector.load %arg17[%c0_47, %c0_48, %c0_49] : memref<1x32x64xbf16, #tpu.memory_space<vmem>>, vector<1x32x64xbf16>
    %83 = vector.shape_cast %82 : vector<1x32x64xbf16> to vector<32x64xbf16>
    %cst_50 = arith.constant dense<0.000000e+00> : vector<8x64xf32>
    %84 = tpu.matmul %81, %83, %cst_50 {dimension_numbers = #tpu.dot_dimension_numbers<[1], [0], [0], [1], [0, 0, 1, 1], [], []>} : vector<8x32xbf16>, vector<32x64xbf16>, vector<8x64xf32> -> vector<8x64xf32>
    %c0_51 = arith.constant 0 : index
    %c0_52 = arith.constant 0 : index
    %c0_53 = arith.constant 0 : index
    %85 = vector.load %arg18[%c0_51, %c0_52, %c0_53] : memref<1x1x64xf32, #tpu.memory_space<vmem>>, vector<1x1x64xf32>
    %86 = vector.shape_cast %85 : vector<1x1x64xf32> to vector<1x64xf32>
    %87 = vector.broadcast %86 : vector<1x64xf32> to vector<8x64xf32>
    %88 = arith.addf %84, %87 : vector<8x64xf32>
    %cst_54 = arith.constant 5.000000e-01 : f32
    %89 = vector.broadcast %cst_54 : f32 to vector<8x64xf32>
    %90 = arith.mulf %89, %88 : vector<8x64xf32>
    %cst_55 = arith.constant 4.471500e-02 : f32
    %91 = vector.broadcast %cst_55 : f32 to vector<8x64xf32>
    %92 = arith.mulf %91, %88 : vector<8x64xf32>
    %93 = arith.mulf %92, %88 : vector<8x64xf32>
    %94 = arith.mulf %93, %88 : vector<8x64xf32>
    %95 = arith.addf %88, %94 : vector<8x64xf32>
    %cst_56 = arith.constant 0.797884583 : f32
    %96 = vector.broadcast %cst_56 : f32 to vector<8x64xf32>
    %97 = arith.mulf %96, %95 : vector<8x64xf32>
    %98 = math.tanh %97 : vector<8x64xf32>
    %cst_57 = arith.constant 1.000000e+00 : f32
    %99 = vector.broadcast %cst_57 : f32 to vector<8x64xf32>
    %100 = arith.addf %99, %98 : vector<8x64xf32>
    %101 = arith.mulf %90, %100 : vector<8x64xf32>
    %102 = arith.truncf %101 : vector<8x64xf32> to vector<8x64xbf16>
    %c0_58 = arith.constant 0 : index
    %c0_59 = arith.constant 0 : index
    %c0_60 = arith.constant 0 : index
    %103 = vector.load %arg19[%c0_58, %c0_59, %c0_60] : memref<1x64x32xbf16, #tpu.memory_space<vmem>>, vector<1x64x32xbf16>
    %104 = vector.shape_cast %103 : vector<1x64x32xbf16> to vector<64x32xbf16>
    %cst_61 = arith.constant dense<0.000000e+00> : vector<8x32xf32>
    %105 = tpu.matmul %102, %104, %cst_61 {dimension_numbers = #tpu.dot_dimension_numbers<[1], [0], [0], [1], [0, 0, 1, 1], [], []>} : vector<8x64xbf16>, vector<64x32xbf16>, vector<8x32xf32> -> vector<8x32xf32>
    %c0_62 = arith.constant 0 : index
    %c0_63 = arith.constant 0 : index
    %c0_64 = arith.constant 0 : index
    %106 = vector.load %arg20[%c0_62, %c0_63, %c0_64] : memref<1x1x32xf32, #tpu.memory_space<vmem>>, vector<1x1x32xf32>
    %107 = vector.shape_cast %106 : vector<1x1x32xf32> to vector<1x32xf32>
    %108 = vector.broadcast %107 : vector<1x32xf32> to vector<8x32xf32>
    %109 = arith.addf %105, %108 : vector<8x32xf32>
    %110 = arith.addf %109, %80 : vector<8x32xf32>
    %c0_65 = arith.constant 0 : index
    %c0_66 = arith.constant 0 : index
    %c0_67 = arith.constant 0 : index
    %111 = vector.load %arg21[%c0_65, %c0_66, %c0_67] : memref<1x1x32xf32, #tpu.memory_space<vmem>>, vector<1x1x32xf32>
    %112 = vector.shape_cast %111 : vector<1x1x32xf32> to vector<1x32xf32>
    %c0_68 = arith.constant 0 : index
    %c0_69 = arith.constant 0 : index
    %c0_70 = arith.constant 0 : index
    %113 = vector.load %arg22[%c0_68, %c0_69, %c0_70] : memref<1x1x32xf32, #tpu.memory_space<vmem>>, vector<1x1x32xf32>
    %114 = vector.shape_cast %113 : vector<1x1x32xf32> to vector<1x32xf32>
    %cst_71 = arith.constant dense<0.000000e+00> : vector<8xf32>
    %115 = vector.multi_reduction <add>, %110, %cst_71 [1] : vector<8x32xf32> to vector<8xf32>
    %116 = vector.shape_cast %115 : vector<8xf32> to vector<8x1xf32>
    %cst_72 = arith.constant 3.200000e+01 : f32
    %117 = vector.broadcast %cst_72 : f32 to vector<8x1xf32>
    %118 = arith.divf %116, %117 : vector<8x1xf32>
    %119 = vector.broadcast %118 : vector<8x1xf32> to vector<8x32xf32>
    %120 = arith.subf %110, %119 : vector<8x32xf32>
    %121 = arith.mulf %120, %120 : vector<8x32xf32>
    %cst_73 = arith.constant dense<0.000000e+00> : vector<8xf32>
    %122 = vector.multi_reduction <add>, %121, %cst_73 [1] : vector<8x32xf32> to vector<8xf32>
    %123 = vector.shape_cast %122 : vector<8xf32> to vector<8x1xf32>
    %cst_74 = arith.constant 3.200000e+01 : f32
    %124 = vector.broadcast %cst_74 : f32 to vector<8x1xf32>
    %125 = arith.divf %123, %124 : vector<8x1xf32>
    %cst_75 = arith.constant 9.99999997E-7 : f32
    %126 = vector.broadcast %cst_75 : f32 to vector<8x1xf32>
    %127 = arith.addf %125, %126 : vector<8x1xf32>
    %128 = math.rsqrt %127 : vector<8x1xf32>
    %129 = vector.broadcast %128 : vector<8x1xf32> to vector<8x32xf32>
    %130 = arith.mulf %120, %129 : vector<8x32xf32>
    %131 = vector.broadcast %112 : vector<1x32xf32> to vector<8x32xf32>
    %132 = arith.mulf %130, %131 : vector<8x32xf32>
    %133 = vector.broadcast %114 : vector<1x32xf32> to vector<8x32xf32>
    %134 = arith.addf %132, %133 : vector<8x32xf32>
    %135 = vector.broadcast %1 : vector<8x1xf32> to vector<8x32xf32>
    %136 = arith.mulf %134, %135 : vector<8x32xf32>
    %c0_76 = arith.constant 0 : index
    %c0_77 = arith.constant 0 : index
    %137 = vector.load %arg24[%c0_76, %c0_77] : memref<8x32xf32, #tpu.memory_space<vmem>>, vector<8x32xf32>
    tpu.vector_store %arg24[%c0_76, %c0_77], %136 {strides = array<i32>} : memref<8x32xf32, #tpu.memory_space<vmem>>, vector<8x32xf32>,
    %c1_i32 = arith.constant 1 : i32
    %138 = arith.cmpi eq, %arg2, %c1_i32 : i32
    %139 = arith.extui %138 : i1 to i32
    %c0_i32_78 = arith.constant 0 : i32
    %140 = arith.cmpi ne, %139, %c0_i32_78 : i32
    scf.if %140 {
      %c0_79 = arith.constant 0 : index
      %c0_80 = arith.constant 0 : index
      %c0_81 = arith.constant 0 : index
      %c0_82 = arith.constant 0 : index
      %141 = vector.load %arg23[%c0_79, %c0_80, %c0_81, %c0_82] : memref<1x1x8x32xf32, #tpu.memory_space<vmem>>, vector<1x1x8x32xf32>
      %142 = vector.shape_cast %141 : vector<1x1x8x32xf32> to vector<8x32xf32>
      %143 = vector.shape_cast %136 : vector<8x32xf32> to vector<1x1x8x32xf32>
      tpu.vector_store %arg23[%c0_79, %c0_80, %c0_81, %c0_82], %143 {strides = array<i32>} : memref<1x1x8x32xf32, #tpu.memory_space<vmem>>, vector<1x1x8x32xf32>,
    } else {
    }
    return
  }
  func.func @transform_0(%arg0: i32, %arg1: i32, %arg2: i32) -> (i32, i32, i32) {
    %c0_i32 = arith.constant 0 : i32
    %c0_i32_0 = arith.constant 0 : i32
    %c0_i32_1 = arith.constant 0 : i32
    return %arg1, %c0_i32, %c0_i32_0 : i32, i32, i32
  }
  func.func @transform_1(%arg0: i32, %arg1: i32, %arg2: i32) -> (i32, i32, i32) {
    %c0_i32 = arith.constant 0 : i32
    %c0_i32_0 = arith.constant 0 : i32
    %c0_i32_1 = arith.constant 0 : i32
    return %arg1, %c0_i32, %c0_i32_0 : i32, i32, i32
  }
  func.func @transform_2(%arg0: i32, %arg1: i32, %arg2: i32) -> (i32, i32, i32) {
    %c0_i32 = arith.constant 0 : i32
    %c0_i32_0 = arith.constant 0 : i32
    %c0_i32_1 = arith.constant 0 : i32
    return %arg1, %c0_i32, %c0_i32_0 : i32, i32, i32
  }
  func.func @transform_3(%arg0: i32, %arg1: i32, %arg2: i32) -> (i32, i32, i32) {
    %c0_i32 = arith.constant 0 : i32
    %c0_i32_0 = arith.constant 0 : i32
    %c0_i32_1 = arith.constant 0 : i32
    return %arg1, %c0_i32, %c0_i32_0 : i32, i32, i32
  }
  func.func @transform_4(%arg0: i32, %arg1: i32, %arg2: i32) -> (i32, i32) {
    %c0_i32 = arith.constant 0 : i32
    %c0_i32_0 = arith.constant 0 : i32
    %c0_i32_1 = arith.constant 0 : i32
    return %c0_i32, %c0_i32_0 : i32, i32
  }
  func.func @transform_5(%arg0: i32, %arg1: i32, %arg2: i32) -> (i32, i32) {
    %c0_i32 = arith.constant 0 : i32
    %c0_i32_0 = arith.constant 0 : i32
    %c0_i32_1 = arith.constant 0 : i32
    return %c0_i32, %c0_i32_0 : i32, i32
  }
  func.func @transform_6(%arg0: i32, %arg1: i32, %arg2: i32) -> (i32, i32) {
    %c0_i32 = arith.constant 0 : i32
    %c0_i32_0 = arith.constant 0 : i32
    %c0_i32_1 = arith.constant 0 : i32
    return %c0_i32, %c0_i32_0 : i32, i32
  }
  func.func @transform_7(%arg0: i32, %arg1: i32, %arg2: i32) -> (i32, i32, i32, i32) {
    %c2_i32 = arith.constant 2 : i32
    %0 = arith.muli %arg0, %c2_i32 : i32
    %1 = arith.addi %0, %arg2 : i32
    %c0_i32 = arith.constant 0 : i32
    %c0_i32_0 = arith.constant 0 : i32
    %c0_i32_1 = arith.constant 0 : i32
    %c0_i32_2 = arith.constant 0 : i32
    return %1, %c0_i32, %c0_i32_0, %c0_i32_1 : i32, i32, i32, i32
  }
  func.func @transform_8(%arg0: i32, %arg1: i32, %arg2: i32) -> (i32, i32, i32, i32) {
    %c2_i32 = arith.constant 2 : i32
    %0 = arith.muli %arg0, %c2_i32 : i32
    %1 = arith.addi %0, %arg2 : i32
    %c0_i32 = arith.constant 0 : i32
    %c0_i32_0 = arith.constant 0 : i32
    %c0_i32_1 = arith.constant 0 : i32
    %c0_i32_2 = arith.constant 0 : i32
    return %1, %c0_i32, %c0_i32_0, %c0_i32_1 : i32, i32, i32, i32
  }
  func.func @transform_9(%arg0: i32, %arg1: i32, %arg2: i32) -> (i32, i32, i32, i32) {
    %c2_i32 = arith.constant 2 : i32
    %0 = arith.muli %arg0, %c2_i32 : i32
    %1 = arith.addi %0, %arg2 : i32
    %c0_i32 = arith.constant 0 : i32
    %c0_i32_0 = arith.constant 0 : i32
    %c0_i32_1 = arith.constant 0 : i32
    %c0_i32_2 = arith.constant 0 : i32
    return %1, %c0_i32, %c0_i32_0, %c0_i32_1 : i32, i32, i32, i32
  }
  func.func @transform_10(%arg0: i32, %arg1: i32, %arg2: i32) -> (i32, i32, i32, i32) {
    %c2_i32 = arith.constant 2 : i32
    %0 = arith.muli %arg0, %c2_i32 : i32
    %1 = arith.addi %0, %arg2 : i32
    %c0_i32 = arith.constant 0 : i32
    %c0_i32_0 = arith.constant 0 : i32
    %c0_i32_1 = arith.constant 0 : i32
    %c0_i32_2 = arith.constant 0 : i32
    return %1, %c0_i32, %c0_i32_0, %c0_i32_1 : i32, i32, i32, i32
  }
  func.func @transform_11(%arg0: i32, %arg1: i32, %arg2: i32) -> (i32, i32, i32) {
    %c2_i32 = arith.constant 2 : i32
    %0 = arith.muli %arg0, %c2_i32 : i32
    %1 = arith.addi %0, %arg2 : i32
    %c0_i32 = arith.constant 0 : i32
    %c0_i32_0 = arith.constant 0 : i32
    %c0_i32_1 = arith.constant 0 : i32
    return %1, %c0_i32, %c0_i32_0 : i32, i32, i32
  }
  func.func @transform_12(%arg0: i32, %arg1: i32, %arg2: i32) -> (i32, i32, i32) {
    %c2_i32 = arith.constant 2 : i32
    %0 = arith.muli %arg0, %c2_i32 : i32
    %1 = arith.addi %0, %arg2 : i32
    %c0_i32 = arith.constant 0 : i32
    %c0_i32_0 = arith.constant 0 : i32
    %c0_i32_1 = arith.constant 0 : i32
    return %1, %c0_i32, %c0_i32_0 : i32, i32, i32
  }
  func.func @transform_13(%arg0: i32, %arg1: i32, %arg2: i32) -> (i32, i32, i32) {
    %c2_i32 = arith.constant 2 : i32
    %0 = arith.muli %arg0, %c2_i32 : i32
    %1 = arith.addi %0, %arg2 : i32
    %c0_i32 = arith.constant 0 : i32
    %c0_i32_0 = arith.constant 0 : i32
    %c0_i32_1 = arith.constant 0 : i32
    return %1, %c0_i32, %c0_i32_0 : i32, i32, i32
  }
  func.func @transform_14(%arg0: i32, %arg1: i32, %arg2: i32) -> (i32, i32, i32) {
    %c2_i32 = arith.constant 2 : i32
    %0 = arith.muli %arg0, %c2_i32 : i32
    %1 = arith.addi %0, %arg2 : i32
    %c0_i32 = arith.constant 0 : i32
    %c0_i32_0 = arith.constant 0 : i32
    %c0_i32_1 = arith.constant 0 : i32
    return %1, %c0_i32, %c0_i32_0 : i32, i32, i32
  }
  func.func @transform_15(%arg0: i32, %arg1: i32, %arg2: i32) -> (i32, i32, i32) {
    %c2_i32 = arith.constant 2 : i32
    %0 = arith.muli %arg0, %c2_i32 : i32
    %1 = arith.addi %0, %arg2 : i32
    %c0_i32 = arith.constant 0 : i32
    %c0_i32_0 = arith.constant 0 : i32
    %c0_i32_1 = arith.constant 0 : i32
    return %1, %c0_i32, %c0_i32_0 : i32, i32, i32
  }
  func.func @transform_16(%arg0: i32, %arg1: i32, %arg2: i32) -> (i32, i32, i32) {
    %c2_i32 = arith.constant 2 : i32
    %0 = arith.muli %arg0, %c2_i32 : i32
    %1 = arith.addi %0, %arg2 : i32
    %c0_i32 = arith.constant 0 : i32
    %c0_i32_0 = arith.constant 0 : i32
    %c0_i32_1 = arith.constant 0 : i32
    return %1, %c0_i32, %c0_i32_0 : i32, i32, i32
  }
  func.func @transform_17(%arg0: i32, %arg1: i32, %arg2: i32) -> (i32, i32, i32) {
    %c2_i32 = arith.constant 2 : i32
    %0 = arith.muli %arg0, %c2_i32 : i32
    %1 = arith.addi %0, %arg2 : i32
    %c0_i32 = arith.constant 0 : i32
    %c0_i32_0 = arith.constant 0 : i32
    %c0_i32_1 = arith.constant 0 : i32
    return %1, %c0_i32, %c0_i32_0 : i32, i32, i32
  }
  func.func @transform_18(%arg0: i32, %arg1: i32, %arg2: i32) -> (i32, i32, i32) {
    %c2_i32 = arith.constant 2 : i32
    %0 = arith.muli %arg0, %c2_i32 : i32
    %1 = arith.addi %0, %arg2 : i32
    %c0_i32 = arith.constant 0 : i32
    %c0_i32_0 = arith.constant 0 : i32
    %c0_i32_1 = arith.constant 0 : i32
    return %1, %c0_i32, %c0_i32_0 : i32, i32, i32
  }
  func.func @transform_19(%arg0: i32, %arg1: i32, %arg2: i32) -> (i32, i32, i32) {
    %c2_i32 = arith.constant 2 : i32
    %0 = arith.muli %arg0, %c2_i32 : i32
    %1 = arith.addi %0, %arg2 : i32
    %c0_i32 = arith.constant 0 : i32
    %c0_i32_0 = arith.constant 0 : i32
    %c0_i32_1 = arith.constant 0 : i32
    return %1, %c0_i32, %c0_i32_0 : i32, i32, i32
  }
  func.func @transform_20(%arg0: i32, %arg1: i32, %arg2: i32) -> (i32, i32, i32, i32) {
    %c0_i32 = arith.constant 0 : i32
    %c0_i32_0 = arith.constant 0 : i32
    %c0_i32_1 = arith.constant 0 : i32
    return %arg0, %arg1, %c0_i32, %c0_i32_0 : i32, i32, i32, i32
  }
}

</mosaic_0001>

<llo_original>
// kernel: tpu_custom_call.1
$region0: #{tpu_custom_call.1}
  #allocation0 [shape = 'u32[]', space=smem, size = 0x4, offset = 0x4, fixed_abs, tag = 'smem constant byte address 0x4 - core index']
  #allocation1 [shape = 'u32[72,128]{1,0:T(1,128)}', space=vmem, size = 0x9000, scoped, tag = 'internal scratch']
  #allocation2 [shape = 'f32[8,32]{1,0:T(8,128)}', space=vmem, size = 0x1000, scoped, tag = 'scratch operand']
  #allocation3 [shape = 'f32[8,8]{1,0:T(8,128)}', space=vmem, size = 0x1000, scoped, tag = 'scratch operand']
  %s0 = inlined_call_operand.vmem [shape: f32[2,8,4], index: 0, kind: input, shape index: {}]
  %s1 = inlined_call_operand.vmem [shape: f32[2,8,1], index: 1, kind: input, shape index: {}]
  %s2 = inlined_call_operand.vmem [shape: f32[2,8,1], index: 2, kind: input, shape index: {}]
  %s3 = inlined_call_operand.vmem [shape: f32[2,1,8], index: 3, kind: input, shape index: {}]
  %s4 = inlined_call_operand.vmem [shape: f32[1,32], index: 4, kind: input, shape index: {}]
  %s5 = inlined_call_operand.vmem [shape: f32[4,32], index: 5, kind: input, shape index: {}]
  %s6 = inlined_call_operand.vmem [shape: f32[1,32], index: 6, kind: input, shape index: {}]
  %s7 = inlined_call_operand.vmem [shape: bf16[6,4,8,32], index: 7, kind: input, shape index: {}]
  %s8 = inlined_call_operand.vmem [shape: bf16[6,4,8,32], index: 8, kind: input, shape index: {}]
  %s9 = inlined_call_operand.vmem [shape: bf16[6,4,8,32], index: 9, kind: input, shape index: {}]
  %s10 = inlined_call_operand.hbm [shape: bf16[6,4,8,32], index: 10, kind: input, shape index: {}]
  %s11 = inlined_call_operand.vmem [shape: f32[6,1,32], index: 11, kind: input, shape index: {}]
  %s12 = inlined_call_operand.vmem [shape: f32[6,1,32], index: 12, kind: input, shape index: {}]
  %s13 = inlined_call_operand.vmem [shape: f32[6,1,32], index: 13, kind: input, shape index: {}]
  %s14 = inlined_call_operand.hbm [shape: bf16[6,32,64], index: 14, kind: input, shape index: {}]
  %s15 = inlined_call_operand.vmem [shape: f32[6,1,64], index: 15, kind: input, shape index: {}]
  %s16 = inlined_call_operand.vmem [shape: bf16[6,64,32], index: 16, kind: input, shape index: {}]
  %s17 = inlined_call_operand.vmem [shape: f32[6,1,32], index: 17, kind: input, shape index: {}]
  %s18 = inlined_call_operand.vmem [shape: f32[6,1,32], index: 18, kind: input, shape index: {}]
  %s19 = inlined_call_operand.vmem [shape: f32[6,1,32], index: 19, kind: input, shape index: {}]
  %s20 = inlined_call_operand.hbm [shape: f32[3,2,8,32], index: 20, kind: output, shape index: {}]
  %s21 = sld [smem:[#allocation0]]
  $region129: #{tpu_custom_call.1} parent=0
    _
  %s23 = ssub.s32 1, %s21
  %s24 = scalar_select 0, %s23, %s21
  $region1: #{tpu_custom_call.1} parent=0
    #allocation4 [shape = 'u8[16384]{0}', space=vmem, size = 0x4000, scoped, tag = 'input window, operand 10']
    #allocation5 [shape = 's32[2]{0}', space=sflag, size = 0x8, scoped, tag = 'scoped memory for tpu_custom_call.1']
    #allocation6 [shape = 's32[2]{0}', space=sflag, size = 0x8, scoped, tag = 'scoped memory for tpu_custom_call.1']
    #allocation7 [shape = 'u8[16384]{0}', space=vmem, size = 0x4000, scoped, tag = 'input window, operand 14']
    #allocation8 [shape = 's32[2]{0}', space=sflag, size = 0x8, scoped, tag = 'scoped memory for tpu_custom_call.1']
    #allocation9 [shape = 'u8[8192]{0}', space=vmem, size = 0x2000, scoped, tag = 'output window, operand 0']
    %25 = vsyncpa [#allocation5], 0
    %s26 = scalar_lea.sflag [#allocation5], 1
    %27 = vsyncpa %s26, 0
    %28 = vsyncpa [#allocation8], 0
    %s29 = scalar_lea.sflag [#allocation8], 1
    %30 = vsyncpa %s29, 0
    %31 = vsyncpa [#allocation6], 0
    %s32 = scalar_lea.sflag [#allocation6], 1
    %33 = vsyncpa %s32, 0
    loop: start=0, step=1, limit=14
    $region2: #{tpu_custom_call.1} parent=1 // loop_pre_header
      _
    $region3: #{tpu_custom_call.1} parent=1 // loop_header
      %s35 = sphi 0, %s39
      %p36 = scmp.ge.s32.totalorder %s35, 14
      %s42 = sphi 0, %s61
      %s43 = sphi 0, %s57
      %s44 = sphi 0, %s53
      %s45 = sphi 0, %s42
      %s46 = sphi 0, %s43
      %s47 = sphi 0, %s44
      %s48 = sphi 0, %s45
      %s49 = sphi 0, %s46
      %s50 = sphi 0, %s47
      %s64 = sphi 0, %s66
      %s67 = sphi 0, %s64
      %s68 = sphi 0, %s67
      %s84 = sphi 0, %s68
      %s90 = sphi 0, %s92
      %s93 = sphi 0, %s90
      %s94 = sphi 0, %s93
      %s110 = sphi 0, %s94
      %s116 = sphi 0, %s118
      %s119 = sphi 0, %s116
      %s120 = sphi 0, %s119
      %s136 = sphi 0, %s120
      %s142 = sphi 0, %s144
      %s145 = sphi 0, %s142
      %s146 = sphi 0, %s145
      %s162 = sphi 0, %s146
      %s166 = sphi 0, %s166
      %s168 = sphi 0, %s166
      %s169 = sphi 0, %s168
      %s183 = sphi 0, %s169
      %s187 = sphi 0, %s187
      %s189 = sphi 0, %s187
      %s190 = sphi 0, %s189
      %s204 = sphi 0, %s190
      %s208 = sphi 0, %s208
      %s210 = sphi 0, %s208
      %s211 = sphi 0, %s210
      %s225 = sphi 0, %s211
      %s235 = sphi 0, %s237
      %s238 = sphi 0, %s235
      %s239 = sphi 0, %s238
      %s255 = sphi 0, %s239
      %s265 = sphi 0, %s267
      %s268 = sphi 0, %s265
      %s269 = sphi 0, %s268
      %s285 = sphi 0, %s269
      %s295 = sphi 0, %s297
      %s298 = sphi 0, %s295
      %s299 = sphi 0, %s298
      %s315 = sphi 0, %s299
      %s325 = sphi 0, %s327
      %s328 = sphi 0, %s325
      %s329 = sphi 0, %s328
      %s345 = sphi 0, %s329
      %s355 = sphi 0, %s357
      %s358 = sphi 0, %s355
      %s359 = sphi 0, %s358
      %s375 = sphi 0, %s359
      %s385 = sphi 0, %s387
      %s388 = sphi 0, %s385
      %s389 = sphi 0, %s388
      %s405 = sphi 0, %s389
      %s415 = sphi 0, %s417
      %s418 = sphi 0, %s415
      %s419 = sphi 0, %s418
      %s435 = sphi 0, %s419
      %s445 = sphi 0, %s447
      %s448 = sphi 0, %s445
      %s449 = sphi 0, %s448
      %s465 = sphi 0, %s449
      %s475 = sphi 0, %s477
      %s478 = sphi 0, %s475
      %s479 = sphi 0, %s478
      %s495 = sphi 0, %s479
      %s505 = sphi 0, %s507
      %s508 = sphi 0, %s505
      %s509 = sphi 0, %s508
      %s525 = sphi 0, %s509
      %s535 = sphi 0, %s537
      %s538 = sphi 0, %s535
      %s539 = sphi 0, %s538
      %s555 = sphi 0, %s539
      %s565 = sphi 0, %s567
      %s568 = sphi 0, %s565
      %s569 = sphi 0, %s568
      %s585 = sphi 0, %s569
      %s595 = sphi 0, %s597
      %s598 = sphi 0, %s595
      %s599 = sphi 0, %s598
      %s615 = sphi 0, %s599
      %s623 = sphi 0, %s625
      %s626 = sphi 0, %s623
      %s627 = sphi 0, %s626
      %s643 = sphi 0, %s627
    $region4: #{tpu_custom_call.1} parent=1 // loop_header_branch
      %38 = sbr.rel (%p36) target = $region8
    $region5: #{tpu_custom_call.1} parent=1 // loop_body
      %s40 = ssub.s32 %s35, 1
      %s41 = ssub.s32 %s35, 2
      %s51 = sadd.s32 1, %s44
      %p52 = scmp.ge.s32.totalorder %s51, 2
      %s53 = scalar_select %p52, 0, %s51
      %s54 = sadd.s32 1, %s43
      %s55 = scalar_select %p52, %s54, %s43
      %p56 = scmp.ge.s32.totalorder %s55, 2
      %s57 = scalar_select %p56, 0, %s55
      %s58 = sadd.s32 1, %s42
      %s59 = scalar_select %p56, %s58, %s42
      %p60 = scmp.ge.s32.totalorder %s59, 3
      %s61 = scalar_select %p60, 0, %s59
      %s62 = ssub.s32 %s43, %s57
      %p63 = scmp.eq.s32.totalorder %s62, 0
      %s65 = sadd.s32 %s64, 1
      %s66 = scalar_select %p63, %s64, %s65
      %p69 = pneg %p63
      %p70 = scmp.eq.s32.totalorder %s35, 11
      %p71 = por %p69, %p70
      %p72 = scmp.ne.s32.totalorder %s64, %s67
      %p73 = scmp.eq.s32.totalorder %s35, 0
      %p74 = por %p72, %p73
      %p75 = scmp.ne.s32.totalorder %s64, %s67
      %p76 = scmp.eq.s32.totalorder %s40, 11
      %p77 = por %p75, %p76
      %p78 = scmp.ne.s32.totalorder %s67, %s68
      %p79 = scmp.eq.s32.totalorder %s40, 0
      %p80 = por %p78, %p79
      %p81 = scmp.ne.s32.totalorder %s67, %s68
      %p82 = scmp.eq.s32.totalorder %s41, 11
      %p83 = por %p81, %p82
      %p85 = scmp.ne.s32.totalorder %s68, %s84
      %p86 = scmp.eq.s32.totalorder %s41, 0
      %p87 = por %p85, %p86
      %s88 = ssub.s32 %s43, %s57
      %p89 = scmp.eq.s32.totalorder %s88, 0
      %s91 = sadd.s32 %s90, 1
      %s92 = scalar_select %p89, %s90, %s91
      %p95 = pneg %p89
      %p96 = scmp.eq.s32.totalorder %s35, 11
      %p97 = por %p95, %p96
      %p98 = scmp.ne.s32.totalorder %s90, %s93
      %p99 = scmp.eq.s32.totalorder %s35, 0
      %p100 = por %p98, %p99
      %p101 = scmp.ne.s32.totalorder %s90, %s93
      %p102 = scmp.eq.s32.totalorder %s40, 11
      %p103 = por %p101, %p102
      %p104 = scmp.ne.s32.totalorder %s93, %s94
      %p105 = scmp.eq.s32.totalorder %s40, 0
      %p106 = por %p104, %p105
      %p107 = scmp.ne.s32.totalorder %s93, %s94
      %p108 = scmp.eq.s32.totalorder %s41, 11
      %p109 = por %p107, %p108
      %p111 = scmp.ne.s32.totalorder %s94, %s110
      %p112 = scmp.eq.s32.totalorder %s41, 0
      %p113 = por %p111, %p112
      %s114 = ssub.s32 %s43, %s57
      %p115 = scmp.eq.s32.totalorder %s114, 0
      %s117 = sadd.s32 %s116, 1
      %s118 = scalar_select %p115, %s116, %s117
      %p121 = pneg %p115
      %p122 = scmp.eq.s32.totalorder %s35, 11
      %p123 = por %p121, %p122
      %p124 = scmp.ne.s32.totalorder %s116, %s119
      %p125 = scmp.eq.s32.totalorder %s35, 0
      %p126 = por %p124, %p125
      %p127 = scmp.ne.s32.totalorder %s116, %s119
      %p128 = scmp.eq.s32.totalorder %s40, 11
      %p129 = por %p127, %p128
      %p130 = scmp.ne.s32.totalorder %s119, %s120
      %p131 = scmp.eq.s32.totalorder %s40, 0
      %p132 = por %p130, %p131
      %p133 = scmp.ne.s32.totalorder %s119, %s120
      %p134 = scmp.eq.s32.totalorder %s41, 11
      %p135 = por %p133, %p134
      %p137 = scmp.ne.s32.totalorder %s120, %s136
      %p138 = scmp.eq.s32.totalorder %s41, 0
      %p139 = por %p137, %p138
      %s140 = ssub.s32 %s43, %s57
      %p141 = scmp.eq.s32.totalorder %s140, 0
      %s143 = sadd.s32 %s142, 1
      %s144 = scalar_select %p141, %s142, %s143
      %p147 = pneg %p141
      %p148 = scmp.eq.s32.totalorder %s35, 11
      %p149 = por %p147, %p148
      %p150 = scmp.ne.s32.totalorder %s142, %s145
      %p151 = scmp.eq.s32.totalorder %s35, 0
      %p152 = por %p150, %p151
      %p153 = scmp.ne.s32.totalorder %s142, %s145
      %p154 = scmp.eq.s32.totalorder %s40, 11
      %p155 = por %p153, %p154
      %p156 = scmp.ne.s32.totalorder %s145, %s146
      %p157 = scmp.eq.s32.totalorder %s40, 0
      %p158 = por %p156, %p157
      %p159 = scmp.ne.s32.totalorder %s145, %s146
      %p160 = scmp.eq.s32.totalorder %s41, 11
      %p161 = por %p159, %p160
      %p163 = scmp.ne.s32.totalorder %s146, %s162
      %p164 = scmp.eq.s32.totalorder %s41, 0
      %p165 = por %p163, %p164
      %s167 = sadd.s32 %s166, 1
      %p170 = scmp.eq.s32.totalorder %s35, 11
      %p171 = scmp.ne.s32.totalorder %s166, %s168
      %p172 = scmp.eq.s32.totalorder %s35, 0
      %p173 = por %p171, %p172
      %p174 = scmp.ne.s32.totalorder %s166, %s168
      %p175 = scmp.eq.s32.totalorder %s40, 11
      %p176 = por %p174, %p175
      %p177 = scmp.ne.s32.totalorder %s168, %s169
      %p178 = scmp.eq.s32.totalorder %s40, 0
      %p179 = por %p177, %p178
      %p180 = scmp.ne.s32.totalorder %s168, %s169
      %p181 = scmp.eq.s32.totalorder %s41, 11
      %p182 = por %p180, %p181
      %p184 = scmp.ne.s32.totalorder %s169, %s183
      %p185 = scmp.eq.s32.totalorder %s41, 0
      %p186 = por %p184, %p185
      %s188 = sadd.s32 %s187, 1
      %p191 = scmp.eq.s32.totalorder %s35, 11
      %p192 = scmp.ne.s32.totalorder %s187, %s189
      %p193 = scmp.eq.s32.totalorder %s35, 0
      %p194 = por %p192, %p193
      %p195 = scmp.ne.s32.totalorder %s187, %s189
      %p196 = scmp.eq.s32.totalorder %s40, 11
      %p197 = por %p195, %p196
      %p198 = scmp.ne.s32.totalorder %s189, %s190
      %p199 = scmp.eq.s32.totalorder %s40, 0
      %p200 = por %p198, %p199
      %p201 = scmp.ne.s32.totalorder %s189, %s190
      %p202 = scmp.eq.s32.totalorder %s41, 11
      %p203 = por %p201, %p202
      %p205 = scmp.ne.s32.totalorder %s190, %s204
      %p206 = scmp.eq.s32.totalorder %s41, 0
      %p207 = por %p205, %p206
      %s209 = sadd.s32 %s208, 1
      %p212 = scmp.eq.s32.totalorder %s35, 11
      %p213 = scmp.ne.s32.totalorder %s208, %s210
      %p214 = scmp.eq.s32.totalorder %s35, 0
      %p215 = por %p213, %p214
      %p216 = scmp.ne.s32.totalorder %s208, %s210
      %p217 = scmp.eq.s32.totalorder %s40, 11
      %p218 = por %p216, %p217
      %p219 = scmp.ne.s32.totalorder %s210, %s211
      %p220 = scmp.eq.s32.totalorder %s40, 0
      %p221 = por %p219, %p220
      %p222 = scmp.ne.s32.totalorder %s210, %s211
      %p223 = scmp.eq.s32.totalorder %s41, 11
      %p224 = por %p222, %p223
      %p226 = scmp.ne.s32.totalorder %s211, %s225
      %p227 = scmp.eq.s32.totalorder %s41, 0
      %p228 = por %p226, %p227
      %s229 = smul.u32 %s42, 2
      %s230 = sadd.s32 %s229, %s44
      %s231 = smul.u32 %s61, 2
      %s232 = sadd.s32 %s231, %s53
      %s233 = ssub.s32 %s230, %s232
      %p234 = scmp.eq.s32.totalorder %s233, 0
      %s236 = sadd.s32 %s235, 1
      %s237 = scalar_select %p234, %s235, %s236
      %p240 = pneg %p234
      %p241 = scmp.eq.s32.totalorder %s35, 11
      %p242 = por %p240, %p241
      %p243 = scmp.ne.s32.totalorder %s235, %s238
      %p244 = scmp.eq.s32.totalorder %s35, 0
      %p245 = por %p243, %p244
      %p246 = scmp.ne.s32.totalorder %s235, %s238
      %p247 = scmp.eq.s32.totalorder %s40, 11
      %p248 = por %p246, %p247
      %p249 = scmp.ne.s32.totalorder %s238, %s239
      %p250 = scmp.eq.s32.totalorder %s40, 0
      %p251 = por %p249, %p250
      %p252 = scmp.ne.s32.totalorder %s238, %s239
      %p253 = scmp.eq.s32.totalorder %s41, 11
      %p254 = por %p252, %p253
      %p256 = scmp.ne.s32.totalorder %s239, %s255
      %p257 = scmp.eq.s32.totalorder %s41, 0
      %p258 = por %p256, %p257
      %s259 = smul.u32 %s42, 2
      %s260 = sadd.s32 %s259, %s44
      %s261 = smul.u32 %s61, 2
      %s262 = sadd.s32 %s261, %s53
      %s263 = ssub.s32 %s260, %s262
      %p264 = scmp.eq.s32.totalorder %s263, 0
      %s266 = sadd.s32 %s265, 1
      %s267 = scalar_select %p264, %s265, %s266
      %p270 = pneg %p264
      %p271 = scmp.eq.s32.totalorder %s35, 11
      %p272 = por %p270, %p271
      %p273 = scmp.ne.s32.totalorder %s265, %s268
      %p274 = scmp.eq.s32.totalorder %s35, 0
      %p275 = por %p273, %p274
      %p276 = scmp.ne.s32.totalorder %s265, %s268
      %p277 = scmp.eq.s32.totalorder %s40, 11
      %p278 = por %p276, %p277
      %p279 = scmp.ne.s32.totalorder %s268, %s269
      %p280 = scmp.eq.s32.totalorder %s40, 0
      %p281 = por %p279, %p280
      %p282 = scmp.ne.s32.totalorder %s268, %s269
      %p283 = scmp.eq.s32.totalorder %s41, 11
      %p284 = por %p282, %p283
      %p286 = scmp.ne.s32.totalorder %s269, %s285
      %p287 = scmp.eq.s32.totalorder %s41, 0
      %p288 = por %p286, %p287
      %s289 = smul.u32 %s42, 2
      %s290 = sadd.s32 %s289, %s44
      %s291 = smul.u32 %s61, 2
      %s292 = sadd.s32 %s291, %s53
      %s293 = ssub.s32 %s290, %s292
      %p294 = scmp.eq.s32.totalorder %s293, 0
      %s296 = sadd.s32 %s295, 1
      %s297 = scalar_select %p294, %s295, %s296
      %p300 = pneg %p294
      %p301 = scmp.eq.s32.totalorder %s35, 11
      %p302 = por %p300, %p301
      %p303 = scmp.ne.s32.totalorder %s295, %s298
      %p304 = scmp.eq.s32.totalorder %s35, 0
      %p305 = por %p303, %p304
      %p306 = scmp.ne.s32.totalorder %s295, %s298
      %p307 = scmp.eq.s32.totalorder %s40, 11
      %p308 = por %p306, %p307
      %p309 = scmp.ne.s32.totalorder %s298, %s299
      %p310 = scmp.eq.s32.totalorder %s40, 0
      %p311 = por %p309, %p310
      %p312 = scmp.ne.s32.totalorder %s298, %s299
      %p313 = scmp.eq.s32.totalorder %s41, 11
      %p314 = por %p312, %p313
      %p316 = scmp.ne.s32.totalorder %s299, %s315
      %p317 = scmp.eq.s32.totalorder %s41, 0
      %p318 = por %p316, %p317
      %s319 = smul.u32 %s42, 2
      %s320 = sadd.s32 %s319, %s44
      %s321 = smul.u32 %s61, 2
      %s322 = sadd.s32 %s321, %s53
      %s323 = ssub.s32 %s320, %s322
      %p324 = scmp.eq.s32.totalorder %s323, 0
      %s326 = sadd.s32 %s325, 1
      %s327 = scalar_select %p324, %s325, %s326
      %p330 = pneg %p324
      %p331 = scmp.eq.s32.totalorder %s35, 11
      %p332 = por %p330, %p331
      %p333 = scmp.ne.s32.totalorder %s325, %s328
      %p334 = scmp.eq.s32.totalorder %s35, 0
      %p335 = por %p333, %p334
      %p336 = scmp.ne.s32.totalorder %s325, %s328
      %p337 = scmp.eq.s32.totalorder %s40, 11
      %p338 = por %p336, %p337
      %p339 = scmp.ne.s32.totalorder %s328, %s329
      %p340 = scmp.eq.s32.totalorder %s40, 0
      %p341 = por %p339, %p340
      %p342 = scmp.ne.s32.totalorder %s328, %s329
      %p343 = scmp.eq.s32.totalorder %s41, 11
      %p344 = por %p342, %p343
      %p346 = scmp.ne.s32.totalorder %s329, %s345
      %p347 = scmp.eq.s32.totalorder %s41, 0
      %p348 = por %p346, %p347
      %s349 = smul.u32 %s42, 2
      %s350 = sadd.s32 %s349, %s44
      %s351 = smul.u32 %s61, 2
      %s352 = sadd.s32 %s351, %s53
      %s353 = ssub.s32 %s350, %s352
      %p354 = scmp.eq.s32.totalorder %s353, 0
      %s356 = sadd.s32 %s355, 1
      %s357 = scalar_select %p354, %s355, %s356
      %p360 = pneg %p354
      %p361 = scmp.eq.s32.totalorder %s35, 11
      %p362 = por %p360, %p361
      %p363 = scmp.ne.s32.totalorder %s355, %s358
      %p364 = scmp.eq.s32.totalorder %s35, 0
      %p365 = por %p363, %p364
      %p366 = scmp.ne.s32.totalorder %s355, %s358
      %p367 = scmp.eq.s32.totalorder %s40, 11
      %p368 = por %p366, %p367
      %p369 = scmp.ne.s32.totalorder %s358, %s359
      %p370 = scmp.eq.s32.totalorder %s40, 0
      %p371 = por %p369, %p370
      %p372 = scmp.ne.s32.totalorder %s358, %s359
      %p373 = scmp.eq.s32.totalorder %s41, 11
      %p374 = por %p372, %p373
      %p376 = scmp.ne.s32.totalorder %s359, %s375
      %p377 = scmp.eq.s32.totalorder %s41, 0
      %p378 = por %p376, %p377
      %s379 = smul.u32 %s42, 2
      %s380 = sadd.s32 %s379, %s44
      %s381 = smul.u32 %s61, 2
      %s382 = sadd.s32 %s381, %s53
      %s383 = ssub.s32 %s380, %s382
      %p384 = scmp.eq.s32.totalorder %s383, 0
      %s386 = sadd.s32 %s385, 1
      %s387 = scalar_select %p384, %s385, %s386
      %p390 = pneg %p384
      %p391 = scmp.eq.s32.totalorder %s35, 11
      %p392 = por %p390, %p391
      %p393 = scmp.ne.s32.totalorder %s385, %s388
      %p394 = scmp.eq.s32.totalorder %s35, 0
      %p395 = por %p393, %p394
      %p396 = scmp.ne.s32.totalorder %s385, %s388
      %p397 = scmp.eq.s32.totalorder %s40, 11
      %p398 = por %p396, %p397
      %p399 = scmp.ne.s32.totalorder %s388, %s389
      %p400 = scmp.eq.s32.totalorder %s40, 0
      %p401 = por %p399, %p400
      %p402 = scmp.ne.s32.totalorder %s388, %s389
      %p403 = scmp.eq.s32.totalorder %s41, 11
      %p404 = por %p402, %p403
      %p406 = scmp.ne.s32.totalorder %s389, %s405
      %p407 = scmp.eq.s32.totalorder %s41, 0
      %p408 = por %p406, %p407
      %s409 = smul.u32 %s42, 2
      %s410 = sadd.s32 %s409, %s44
      %s411 = smul.u32 %s61, 2
      %s412 = sadd.s32 %s411, %s53
      %s413 = ssub.s32 %s410, %s412
      %p414 = scmp.eq.s32.totalorder %s413, 0
      %s416 = sadd.s32 %s415, 1
      %s417 = scalar_select %p414, %s415, %s416
      %p420 = pneg %p414
      %p421 = scmp.eq.s32.totalorder %s35, 11
      %p422 = por %p420, %p421
      %p423 = scmp.ne.s32.totalorder %s415, %s418
      %p424 = scmp.eq.s32.totalorder %s35, 0
      %p425 = por %p423, %p424
      %p426 = scmp.ne.s32.totalorder %s415, %s418
      %p427 = scmp.eq.s32.totalorder %s40, 11
      %p428 = por %p426, %p427
      %p429 = scmp.ne.s32.totalorder %s418, %s419
      %p430 = scmp.eq.s32.totalorder %s40, 0
      %p431 = por %p429, %p430
      %p432 = scmp.ne.s32.totalorder %s418, %s419
      %p433 = scmp.eq.s32.totalorder %s41, 11
      %p434 = por %p432, %p433
      %p436 = scmp.ne.s32.totalorder %s419, %s435
      %p437 = scmp.eq.s32.totalorder %s41, 0
      %p438 = por %p436, %p437
      %s439 = smul.u32 %s42, 2
      %s440 = sadd.s32 %s439, %s44
      %s441 = smul.u32 %s61, 2
      %s442 = sadd.s32 %s441, %s53
      %s443 = ssub.s32 %s440, %s442
      %p444 = scmp.eq.s32.totalorder %s443, 0
      %s446 = sadd.s32 %s445, 1
      %s447 = scalar_select %p444, %s445, %s446
      %p450 = pneg %p444
      %p451 = scmp.eq.s32.totalorder %s35, 11
      %p452 = por %p450, %p451
      %p453 = scmp.ne.s32.totalorder %s445, %s448
      %p454 = scmp.eq.s32.totalorder %s35, 0
      %p455 = por %p453, %p454
      %p456 = scmp.ne.s32.totalorder %s445, %s448
      %p457 = scmp.eq.s32.totalorder %s40, 11
      %p458 = por %p456, %p457
      %p459 = scmp.ne.s32.totalorder %s448, %s449
      %p460 = scmp.eq.s32.totalorder %s40, 0
      %p461 = por %p459, %p460
      %p462 = scmp.ne.s32.totalorder %s448, %s449
      %p463 = scmp.eq.s32.totalorder %s41, 11
      %p464 = por %p462, %p463
      %p466 = scmp.ne.s32.totalorder %s449, %s465
      %p467 = scmp.eq.s32.totalorder %s41, 0
      %p468 = por %p466, %p467
      %s469 = smul.u32 %s42, 2
      %s470 = sadd.s32 %s469, %s44
      %s471 = smul.u32 %s61, 2
      %s472 = sadd.s32 %s471, %s53
      %s473 = ssub.s32 %s470, %s472
      %p474 = scmp.eq.s32.totalorder %s473, 0
      %s476 = sadd.s32 %s475, 1
      %s477 = scalar_select %p474, %s475, %s476
      %p480 = pneg %p474
      %p481 = scmp.eq.s32.totalorder %s35, 11
      %p482 = por %p480, %p481
      %p483 = scmp.ne.s32.totalorder %s475, %s478
      %p484 = scmp.eq.s32.totalorder %s35, 0
      %p485 = por %p483, %p484
      %p486 = scmp.ne.s32.totalorder %s475, %s478
      %p487 = scmp.eq.s32.totalorder %s40, 11
      %p488 = por %p486, %p487
      %p489 = scmp.ne.s32.totalorder %s478, %s479
      %p490 = scmp.eq.s32.totalorder %s40, 0
      %p491 = por %p489, %p490
      %p492 = scmp.ne.s32.totalorder %s478, %s479
      %p493 = scmp.eq.s32.totalorder %s41, 11
      %p494 = por %p492, %p493
      %p496 = scmp.ne.s32.totalorder %s479, %s495
      %p497 = scmp.eq.s32.totalorder %s41, 0
      %p498 = por %p496, %p497
      %s499 = smul.u32 %s42, 2
      %s500 = sadd.s32 %s499, %s44
      %s501 = smul.u32 %s61, 2
      %s502 = sadd.s32 %s501, %s53
      %s503 = ssub.s32 %s500, %s502
      %p504 = scmp.eq.s32.totalorder %s503, 0
      %s506 = sadd.s32 %s505, 1
      %s507 = scalar_select %p504, %s505, %s506
      %p510 = pneg %p504
      %p511 = scmp.eq.s32.totalorder %s35, 11
      %p512 = por %p510, %p511
      %p513 = scmp.ne.s32.totalorder %s505, %s508
      %p514 = scmp.eq.s32.totalorder %s35, 0
      %p515 = por %p513, %p514
      %p516 = scmp.ne.s32.totalorder %s505, %s508
      %p517 = scmp.eq.s32.totalorder %s40, 11
      %p518 = por %p516, %p517
      %p519 = scmp.ne.s32.totalorder %s508, %s509
      %p520 = scmp.eq.s32.totalorder %s40, 0
      %p521 = por %p519, %p520
      %p522 = scmp.ne.s32.totalorder %s508, %s509
      %p523 = scmp.eq.s32.totalorder %s41, 11
      %p524 = por %p522, %p523
      %p526 = scmp.ne.s32.totalorder %s509, %s525
      %p527 = scmp.eq.s32.totalorder %s41, 0
      %p528 = por %p526, %p527
      %s529 = smul.u32 %s42, 2
      %s530 = sadd.s32 %s529, %s44
      %s531 = smul.u32 %s61, 2
      %s532 = sadd.s32 %s531, %s53
      %s533 = ssub.s32 %s530, %s532
      %p534 = scmp.eq.s32.totalorder %s533, 0
      %s536 = sadd.s32 %s535, 1
      %s537 = scalar_select %p534, %s535, %s536
      %p540 = pneg %p534
      %p541 = scmp.eq.s32.totalorder %s35, 11
      %p542 = por %p540, %p541
      %p543 = scmp.ne.s32.totalorder %s535, %s538
      %p544 = scmp.eq.s32.totalorder %s35, 0
      %p545 = por %p543, %p544
      %p546 = scmp.ne.s32.totalorder %s535, %s538
      %p547 = scmp.eq.s32.totalorder %s40, 11
      %p548 = por %p546, %p547
      %p549 = scmp.ne.s32.totalorder %s538, %s539
      %p550 = scmp.eq.s32.totalorder %s40, 0
      %p551 = por %p549, %p550
      %p552 = scmp.ne.s32.totalorder %s538, %s539
      %p553 = scmp.eq.s32.totalorder %s41, 11
      %p554 = por %p552, %p553
      %p556 = scmp.ne.s32.totalorder %s539, %s555
      %p557 = scmp.eq.s32.totalorder %s41, 0
      %p558 = por %p556, %p557
      %s559 = smul.u32 %s42, 2
      %s560 = sadd.s32 %s559, %s44
      %s561 = smul.u32 %s61, 2
      %s562 = sadd.s32 %s561, %s53
      %s563 = ssub.s32 %s560, %s562
      %p564 = scmp.eq.s32.totalorder %s563, 0
      %s566 = sadd.s32 %s565, 1
      %s567 = scalar_select %p564, %s565, %s566
      %p570 = pneg %p564
      %p571 = scmp.eq.s32.totalorder %s35, 11
      %p572 = por %p570, %p571
      %p573 = scmp.ne.s32.totalorder %s565, %s568
      %p574 = scmp.eq.s32.totalorder %s35, 0
      %p575 = por %p573, %p574
      %p576 = scmp.ne.s32.totalorder %s565, %s568
      %p577 = scmp.eq.s32.totalorder %s40, 11
      %p578 = por %p576, %p577
      %p579 = scmp.ne.s32.totalorder %s568, %s569
      %p580 = scmp.eq.s32.totalorder %s40, 0
      %p581 = por %p579, %p580
      %p582 = scmp.ne.s32.totalorder %s568, %s569
      %p583 = scmp.eq.s32.totalorder %s41, 11
      %p584 = por %p582, %p583
      %p586 = scmp.ne.s32.totalorder %s569, %s585
      %p587 = scmp.eq.s32.totalorder %s41, 0
      %p588 = por %p586, %p587
      %s589 = smul.u32 %s42, 2
      %s590 = sadd.s32 %s589, %s44
      %s591 = smul.u32 %s61, 2
      %s592 = sadd.s32 %s591, %s53
      %s593 = ssub.s32 %s590, %s592
      %p594 = scmp.eq.s32.totalorder %s593, 0
      %s596 = sadd.s32 %s595, 1
      %s597 = scalar_select %p594, %s595, %s596
      %p600 = pneg %p594
      %p601 = scmp.eq.s32.totalorder %s35, 11
      %p602 = por %p600, %p601
      %p603 = scmp.ne.s32.totalorder %s595, %s598
      %p604 = scmp.eq.s32.totalorder %s35, 0
      %p605 = por %p603, %p604
      %p606 = scmp.ne.s32.totalorder %s595, %s598
      %p607 = scmp.eq.s32.totalorder %s40, 11
      %p608 = por %p606, %p607
      %p609 = scmp.ne.s32.totalorder %s598, %s599
      %p610 = scmp.eq.s32.totalorder %s40, 0
      %p611 = por %p609, %p610
      %p612 = scmp.ne.s32.totalorder %s598, %s599
      %p613 = scmp.eq.s32.totalorder %s41, 11
      %p614 = por %p612, %p613
      %p616 = scmp.ne.s32.totalorder %s599, %s615
      %p617 = scmp.eq.s32.totalorder %s41, 0
      %p618 = por %p616, %p617
      %s619 = ssub.s32 %s42, %s61
      %s620 = ssub.s32 %s43, %s57
      %s621 = sor.u32 %s619, %s620
      %p622 = scmp.eq.s32.totalorder %s621, 0
      %s624 = sadd.s32 %s623, 1
      %s625 = scalar_select %p622, %s623, %s624
      %p628 = pneg %p622
      %p629 = scmp.eq.s32.totalorder %s35, 11
      %p630 = por %p628, %p629
      %p631 = scmp.ne.s32.totalorder %s623, %s626
      %p632 = scmp.eq.s32.totalorder %s35, 0
      %p633 = por %p631, %p632
      %p634 = scmp.ne.s32.totalorder %s623, %s626
      %p635 = scmp.eq.s32.totalorder %s40, 11
      %p636 = por %p634, %p635
      %p637 = scmp.ne.s32.totalorder %s626, %s627
      %p638 = scmp.eq.s32.totalorder %s40, 0
      %p639 = por %p637, %p638
      %p640 = scmp.ne.s32.totalorder %s626, %s627
      %p641 = scmp.eq.s32.totalorder %s41, 11
      %p642 = por %p640, %p641
      %p644 = scmp.ne.s32.totalorder %s627, %s643
      %p645 = scmp.eq.s32.totalorder %s41, 0
      %p646 = por %p644, %p645
      %p647 = scmp.le.s32.totalorder 1, %s35
      %p648 = scmp.lt.s32.totalorder %s35, 13
      %p649 = pnand %p647, %p648
      %p650 = pneg %p649
      // Predicated region
      $region9: #{tpu_custom_call.1} parent=5 // pred_check
        _
      $region10: #{tpu_custom_call.1} parent=5 // pred_check_branch
        %652 = sbr.rel (%p649) target = $region12
      $region11: #{tpu_custom_call.1} parent=5 // pred_region
        %s653 = ssub.s32 %s35, 1
        // Predicated region
        $region13: #{tpu_custom_call.1} parent=11 // pred_check
          %p654 = pneg %p179
        $region14: #{tpu_custom_call.1} parent=11 // pred_check_branch
          %656 = sbr.rel (%p654) target = $region16
        $region15: #{tpu_custom_call.1} parent=11 // pred_region
          _
        $region16: #{tpu_custom_call.1} parent=11 // pred_fallthru
          _
        // Predicated region
        $region17: #{tpu_custom_call.1} parent=11 // pred_check
          %p657 = pneg %p200
        $region18: #{tpu_custom_call.1} parent=11 // pred_check_branch
          %659 = sbr.rel (%p657) target = $region20
        $region19: #{tpu_custom_call.1} parent=11 // pred_region
          _
        $region20: #{tpu_custom_call.1} parent=11 // pred_fallthru
          _
        // Predicated region
        $region21: #{tpu_custom_call.1} parent=11 // pred_check
          %p660 = pneg %p221
        $region22: #{tpu_custom_call.1} parent=11 // pred_check_branch
          %662 = sbr.rel (%p660) target = $region24
        $region23: #{tpu_custom_call.1} parent=11 // pred_region
          _
        $region24: #{tpu_custom_call.1} parent=11 // pred_fallthru
          _
      $region12: #{tpu_custom_call.1} parent=5 // pred_fallthru
        _
      %p663 = scmp.lt.s32.totalorder %s35, 12
      // Predicated region
      $region25: #{tpu_custom_call.1} parent=5 // pred_check
        %p664 = pneg %p663
      $region26: #{tpu_custom_call.1} parent=5 // pred_check_branch
        %666 = sbr.rel (%p664) target = $region28
      $region27: #{tpu_custom_call.1} parent=5 // pred_region
        // Predicated region
        $region29: #{tpu_custom_call.1} parent=27 // pred_check
          %p667 = pneg %p74
        $region30: #{tpu_custom_call.1} parent=27 // pred_check_branch
          %669 = sbr.rel (%p667) target = $region32
        $region31: #{tpu_custom_call.1} parent=27 // pred_region
          %p670 = scmp.lt.s32.totalorder %s43, 1
          %s671 = scalar_select %p670, %s43, 1
          %s672 = smul.addr %s671, 8
          %s673 = scalar_lea.vmem %s0, %s672
        $region32: #{tpu_custom_call.1} parent=27 // pred_fallthru
          _
        // Predicated region
        $region33: #{tpu_custom_call.1} parent=27 // pred_check
          %p674 = pneg %p100
        $region34: #{tpu_custom_call.1} parent=27 // pred_check_branch
          %676 = sbr.rel (%p674) target = $region36
        $region35: #{tpu_custom_call.1} parent=27 // pred_region
          %p677 = scmp.lt.s32.totalorder %s43, 1
          %s678 = scalar_select %p677, %s43, 1
          %s679 = smul.addr %s678, 8
          %s680 = scalar_lea.vmem %s1, %s679
        $region36: #{tpu_custom_call.1} parent=27 // pred_fallthru
          _
        // Predicated region
        $region37: #{tpu_custom_call.1} parent=27 // pred_check
          %p681 = pneg %p126
        $region38: #{tpu_custom_call.1} parent=27 // pred_check_branch
          %683 = sbr.rel (%p681) target = $region40
        $region39: #{tpu_custom_call.1} parent=27 // pred_region
          %p684 = scmp.lt.s32.totalorder %s43, 1
          %s685 = scalar_select %p684, %s43, 1
          %s686 = smul.addr %s685, 8
          %s687 = scalar_lea.vmem %s2, %s686
        $region40: #{tpu_custom_call.1} parent=27 // pred_fallthru
          _
        // Predicated region
        $region41: #{tpu_custom_call.1} parent=27 // pred_check
          %p688 = pneg %p152
        $region42: #{tpu_custom_call.1} parent=27 // pred_check_branch
          %690 = sbr.rel (%p688) target = $region44
        $region43: #{tpu_custom_call.1} parent=27 // pred_region
          %p691 = scmp.lt.s32.totalorder %s43, 1
          %s692 = scalar_select %p691, %s43, 1
          %s693 = scalar_lea.vmem %s3, %s692
        $region44: #{tpu_custom_call.1} parent=27 // pred_fallthru
          _
        // Predicated region
        $region45: #{tpu_custom_call.1} parent=27 // pred_check
          %p694 = pneg %p245
        $region46: #{tpu_custom_call.1} parent=27 // pred_check_branch
          %696 = sbr.rel (%p694) target = $region48
        $region47: #{tpu_custom_call.1} parent=27 // pred_region
          %s697 = smul.u32 %s42, 2
          %s698 = sadd.s32 %s697, %s44
          %p699 = scmp.lt.s32.totalorder %s698, 5
          %s700 = scalar_select %p699, %s698, 5
          %s701 = smul.addr %s700, 4
          %s702 = smul.addr %s701, 4
          %s703 = scalar_lea.vmem %s7, %s702
          %s704 = smul.u32 %s42, 2
          %s705 = sadd.s32 %s704, %s44
        $region48: #{tpu_custom_call.1} parent=27 // pred_fallthru
          _
        // Predicated region
        $region49: #{tpu_custom_call.1} parent=27 // pred_check
          %p706 = pneg %p275
        $region50: #{tpu_custom_call.1} parent=27 // pred_check_branch
          %708 = sbr.rel (%p706) target = $region52
        $region51: #{tpu_custom_call.1} parent=27 // pred_region
          %s709 = smul.u32 %s42, 2
          %s710 = sadd.s32 %s709, %s44
          %p711 = scmp.lt.s32.totalorder %s710, 5
          %s712 = scalar_select %p711, %s710, 5
          %s713 = smul.addr %s712, 4
          %s714 = smul.addr %s713, 4
          %s715 = scalar_lea.vmem %s8, %s714
          %s716 = smul.u32 %s42, 2
          %s717 = sadd.s32 %s716, %s44
        $region52: #{tpu_custom_call.1} parent=27 // pred_fallthru
          _
        // Predicated region
        $region53: #{tpu_custom_call.1} parent=27 // pred_check
          %p718 = pneg %p305
        $region54: #{tpu_custom_call.1} parent=27 // pred_check_branch
          %720 = sbr.rel (%p718) target = $region56
        $region55: #{tpu_custom_call.1} parent=27 // pred_region
          %s721 = smul.u32 %s42, 2
          %s722 = sadd.s32 %s721, %s44
          %p723 = scmp.lt.s32.totalorder %s722, 5
          %s724 = scalar_select %p723, %s722, 5
          %s725 = smul.addr %s724, 4
          %s726 = smul.addr %s725, 4
          %s727 = scalar_lea.vmem %s9, %s726
          %s728 = smul.u32 %s42, 2
          %s729 = sadd.s32 %s728, %s44
        $region56: #{tpu_custom_call.1} parent=27 // pred_fallthru
          _
        // Predicated region
        $region57: #{tpu_custom_call.1} parent=27 // pred_check
          %p730 = pneg %p335
        $region58: #{tpu_custom_call.1} parent=27 // pred_check_branch
          %732 = sbr.rel (%p730) target = $region60
        $region59: #{tpu_custom_call.1} parent=27 // pred_region
          %s733 = sand.u32 %s325, 1
          %s734 = scalar_lea.sflag [#allocation5], %s733
          %s735 = sand.u32 %s325, 1
          %s736 = smul.addr %s735, 16
          %s737 = scalar_lea.vmem [#allocation4], %s736
          %s738 = smul.u32 %s42, 2
          %s739 = sadd.s32 %s738, %s44
          %741 = vsyncadd %s734, 0
          %s742 = smul.addr %s739, 4
          %s743 = smul.addr %s742, 4
          %s744 = scalar_lea.hbm %s10, %s743
          %s745 = sshll.u32 %s744, 4
          %s746 = int_to_ptr.hbm [resolvable:$true] %s745
          %s747 = sshll.u32 %s737, 4
          %s748 = int_to_ptr.vmem [resolvable:$true] %s747
          %753 = dma.hbm_to_vmem [thread:$0]  %s746, 256, %s748, %s734, 64, 64, 4
        $region60: #{tpu_custom_call.1} parent=27 // pred_fallthru
          _
        // Predicated region
        $region61: #{tpu_custom_call.1} parent=27 // pred_check
          %p754 = pneg %p365
        $region62: #{tpu_custom_call.1} parent=27 // pred_check_branch
          %756 = sbr.rel (%p754) target = $region64
        $region63: #{tpu_custom_call.1} parent=27 // pred_region
          %s757 = smul.u32 %s42, 2
          %s758 = sadd.s32 %s757, %s44
          %p759 = scmp.lt.s32.totalorder %s758, 5
          %s760 = scalar_select %p759, %s758, 5
          %s761 = scalar_lea.vmem %s11, %s760
          %s762 = smul.u32 %s42, 2
          %s763 = sadd.s32 %s762, %s44
        $region64: #{tpu_custom_call.1} parent=27 // pred_fallthru
          _
        // Predicated region
        $region65: #{tpu_custom_call.1} parent=27 // pred_check
          %p764 = pneg %p395
        $region66: #{tpu_custom_call.1} parent=27 // pred_check_branch
          %766 = sbr.rel (%p764) target = $region68
        $region67: #{tpu_custom_call.1} parent=27 // pred_region
          %s767 = smul.u32 %s42, 2
          %s768 = sadd.s32 %s767, %s44
          %p769 = scmp.lt.s32.totalorder %s768, 5
          %s770 = scalar_select %p769, %s768, 5
          %s771 = scalar_lea.vmem %s12, %s770
          %s772 = smul.u32 %s42, 2
          %s773 = sadd.s32 %s772, %s44
        $region68: #{tpu_custom_call.1} parent=27 // pred_fallthru
          _
        // Predicated region
        $region69: #{tpu_custom_call.1} parent=27 // pred_check
          %p774 = pneg %p425
        $region70: #{tpu_custom_call.1} parent=27 // pred_check_branch
          %776 = sbr.rel (%p774) target = $region72
        $region71: #{tpu_custom_call.1} parent=27 // pred_region
          %s777 = smul.u32 %s42, 2
          %s778 = sadd.s32 %s777, %s44
          %p779 = scmp.lt.s32.totalorder %s778, 5
          %s780 = scalar_select %p779, %s778, 5
          %s781 = scalar_lea.vmem %s13, %s780
          %s782 = smul.u32 %s42, 2
          %s783 = sadd.s32 %s782, %s44
        $region72: #{tpu_custom_call.1} parent=27 // pred_fallthru
          _
        // Predicated region
        $region73: #{tpu_custom_call.1} parent=27 // pred_check
          %p784 = pneg %p455
        $region74: #{tpu_custom_call.1} parent=27 // pred_check_branch
          %786 = sbr.rel (%p784) target = $region76
        $region75: #{tpu_custom_call.1} parent=27 // pred_region
          %s787 = sand.u32 %s445, 1
          %s788 = scalar_lea.sflag [#allocation8], %s787
          %s789 = sand.u32 %s445, 1
          %s790 = smul.addr %s789, 16
          %s791 = scalar_lea.vmem [#allocation7], %s790
          %s792 = smul.u32 %s42, 2
          %s793 = sadd.s32 %s792, %s44
          %795 = vsyncadd %s788, 0
          %s796 = smul.addr %s793, 4
          %s797 = smul.addr %s796, 4
          %s798 = scalar_lea.hbm %s14, %s797
          %s799 = sshll.u32 %s798, 4
          %s800 = int_to_ptr.hbm [resolvable:$true] %s799
          %s801 = sshll.u32 %s791, 4
          %s802 = int_to_ptr.vmem [resolvable:$true] %s801
          %807 = dma.hbm_to_vmem [thread:$0]  %s800, 256, %s802, %s788, 64, 64, 4
        $region76: #{tpu_custom_call.1} parent=27 // pred_fallthru
          _
        // Predicated region
        $region77: #{tpu_custom_call.1} parent=27 // pred_check
          %p808 = pneg %p485
        $region78: #{tpu_custom_call.1} parent=27 // pred_check_branch
          %810 = sbr.rel (%p808) target = $region80
        $region79: #{tpu_custom_call.1} parent=27 // pred_region
          %s811 = smul.u32 %s42, 2
          %s812 = sadd.s32 %s811, %s44
          %p813 = scmp.lt.s32.totalorder %s812, 5
          %s814 = scalar_select %p813, %s812, 5
          %s815 = scalar_lea.vmem %s15, %s814
          %s816 = smul.u32 %s42, 2
          %s817 = sadd.s32 %s816, %s44
        $region80: #{tpu_custom_call.1} parent=27 // pred_fallthru
          _
        // Predicated region
        $region81: #{tpu_custom_call.1} parent=27 // pred_check
          %p818 = pneg %p515
        $region82: #{tpu_custom_call.1} parent=27 // pred_check_branch
          %820 = sbr.rel (%p818) target = $region84
        $region83: #{tpu_custom_call.1} parent=27 // pred_region
          %s821 = smul.u32 %s42, 2
          %s822 = sadd.s32 %s821, %s44
          %p823 = scmp.lt.s32.totalorder %s822, 5
          %s824 = scalar_select %p823, %s822, 5
          %s825 = smul.addr %s824, 8
          %s826 = smul.addr %s825, 4
          %s827 = scalar_lea.vmem %s16, %s826
          %s828 = smul.u32 %s42, 2
          %s829 = sadd.s32 %s828, %s44
        $region84: #{tpu_custom_call.1} parent=27 // pred_fallthru
          _
        // Predicated region
        $region85: #{tpu_custom_call.1} parent=27 // pred_check
          %p830 = pneg %p545
        $region86: #{tpu_custom_call.1} parent=27 // pred_check_branch
          %832 = sbr.rel (%p830) target = $region88
        $region87: #{tpu_custom_call.1} parent=27 // pred_region
          %s833 = smul.u32 %s42, 2
          %s834 = sadd.s32 %s833, %s44
          %p835 = scmp.lt.s32.totalorder %s834, 5
          %s836 = scalar_select %p835, %s834, 5
          %s837 = scalar_lea.vmem %s17, %s836
          %s838 = smul.u32 %s42, 2
          %s839 = sadd.s32 %s838, %s44
        $region88: #{tpu_custom_call.1} parent=27 // pred_fallthru
          _
        // Predicated region
        $region89: #{tpu_custom_call.1} parent=27 // pred_check
          %p840 = pneg %p575
        $region90: #{tpu_custom_call.1} parent=27 // pred_check_branch
          %842 = sbr.rel (%p840) target = $region92
        $region91: #{tpu_custom_call.1} parent=27 // pred_region
          %s843 = smul.u32 %s42, 2
          %s844 = sadd.s32 %s843, %s44
          %p845 = scmp.lt.s32.totalorder %s844, 5
          %s846 = scalar_select %p845, %s844, 5
          %s847 = scalar_lea.vmem %s18, %s846
          %s848 = smul.u32 %s42, 2
          %s849 = sadd.s32 %s848, %s44
        $region92: #{tpu_custom_call.1} parent=27 // pred_fallthru
          _
        // Predicated region
        $region93: #{tpu_custom_call.1} parent=27 // pred_check
          %p850 = pneg %p605
        $region94: #{tpu_custom_call.1} parent=27 // pred_check_branch
          %852 = sbr.rel (%p850) target = $region96
        $region95: #{tpu_custom_call.1} parent=27 // pred_region
          %s853 = smul.u32 %s42, 2
          %s854 = sadd.s32 %s853, %s44
          %p855 = scmp.lt.s32.totalorder %s854, 5
          %s856 = scalar_select %p855, %s854, 5
          %s857 = scalar_lea.vmem %s19, %s856
          %s858 = smul.u32 %s42, 2
          %s859 = sadd.s32 %s858, %s44
        $region96: #{tpu_custom_call.1} parent=27 // pred_fallthru
          _
      $region28: #{tpu_custom_call.1} parent=5 // pred_fallthru
        _
      %p860 = scmp.le.s32.totalorder 1, %s35
      %p861 = scmp.lt.s32.totalorder %s35, 13
      %p862 = pnand %p860, %p861
      %p863 = pneg %p862
      // Predicated region
      $region97: #{tpu_custom_call.1} parent=5 // pred_check
        _
      $region98: #{tpu_custom_call.1} parent=5 // pred_check_branch
        %865 = sbr.rel (%p862) target = $region100
      $region99: #{tpu_custom_call.1} parent=5 // pred_region
        %s866 = ssub.s32 %s35, 1
        %s867 = sand.u32 %s328, 1
        %s868 = scalar_lea.sflag [#allocation5], %s867
        %s869 = sand.u32 %s328, 1
        %s870 = smul.addr %s869, 16
        %s871 = scalar_lea.vmem [#allocation4], %s870
        // Predicated region
        $region101: #{tpu_custom_call.1} parent=99 // pred_check
          %p872 = pneg %p341
        $region102: #{tpu_custom_call.1} parent=99 // pred_check_branch
          %874 = sbr.rel (%p872) target = $region104
        $region103: #{tpu_custom_call.1} parent=99 // pred_region
          %876 = dma.done %s868, 256
        $region104: #{tpu_custom_call.1} parent=99 // pred_fallthru
          _
        %s877 = sand.u32 %s448, 1
        %s878 = scalar_lea.sflag [#allocation8], %s877
        %s879 = sand.u32 %s448, 1
        %s880 = smul.addr %s879, 16
        %s881 = scalar_lea.vmem [#allocation7], %s880
        // Predicated region
        $region105: #{tpu_custom_call.1} parent=99 // pred_check
          %p882 = pneg %p461
        $region106: #{tpu_custom_call.1} parent=99 // pred_check_branch
          %884 = sbr.rel (%p882) target = $region108
        $region107: #{tpu_custom_call.1} parent=99 // pred_region
          %886 = dma.done %s878, 256
        $region108: #{tpu_custom_call.1} parent=99 // pred_fallthru
          _
        %p887 = scmp.lt.s32.totalorder %s46, 1
        %s888 = scalar_select %p887, %s46, 1
        %s889 = smul.addr %s888, 8
        %s890 = scalar_lea.vmem %s0, %s889
        %p891 = pneg %p80
        %p892 = pneg %p77
        %p893 = scmp.lt.s32.totalorder %s46, 1
        %s894 = scalar_select %p893, %s46, 1
        %s895 = smul.addr %s894, 8
        %s896 = scalar_lea.vmem %s1, %s895
        %p897 = pneg %p106
        %p898 = pneg %p103
        %p899 = scmp.lt.s32.totalorder %s46, 1
        %s900 = scalar_select %p899, %s46, 1
        %s901 = smul.addr %s900, 8
        %s902 = scalar_lea.vmem %s2, %s901
        %p903 = pneg %p132
        %p904 = pneg %p129
        %p905 = scmp.lt.s32.totalorder %s46, 1
        %s906 = scalar_select %p905, %s46, 1
        %s907 = scalar_lea.vmem %s3, %s906
        %p908 = pneg %p158
        %p909 = pneg %p155
        %p910 = pneg %p179
        %p911 = pneg %p176
        %p912 = pneg %p200
        %p913 = pneg %p197
        %p914 = pneg %p221
        %p915 = pneg %p218
        %s916 = smul.u32 %s45, 2
        %s917 = sadd.s32 %s916, %s47
        %p918 = scmp.lt.s32.totalorder %s917, 5
        %s919 = scalar_select %p918, %s917, 5
        %s920 = smul.addr %s919, 4
        %s921 = smul.addr %s920, 4
        %s922 = scalar_lea.vmem %s7, %s921
        %p923 = pneg %p251
        %p924 = pneg %p248
        %s925 = smul.u32 %s45, 2
        %s926 = sadd.s32 %s925, %s47
        %p927 = scmp.lt.s32.totalorder %s926, 5
        %s928 = scalar_select %p927, %s926, 5
        %s929 = smul.addr %s928, 4
        %s930 = smul.addr %s929, 4
        %s931 = scalar_lea.vmem %s8, %s930
        %p932 = pneg %p281
        %p933 = pneg %p278
        %s934 = smul.u32 %s45, 2
        %s935 = sadd.s32 %s934, %s47
        %p936 = scmp.lt.s32.totalorder %s935, 5
        %s937 = scalar_select %p936, %s935, 5
        %s938 = smul.addr %s937, 4
        %s939 = smul.addr %s938, 4
        %s940 = scalar_lea.vmem %s9, %s939
        %p941 = pneg %p311
        %p942 = pneg %p308
        %s943 = sand.u32 %s328, 1
        %s944 = scalar_lea.sflag [#allocation5], %s943
        %s945 = sand.u32 %s328, 1
        %s946 = smul.addr %s945, 16
        %s947 = scalar_lea.vmem [#allocation4], %s946
        %p948 = pneg %p341
        %p949 = pneg %p338
        %s950 = smul.u32 %s45, 2
        %s951 = sadd.s32 %s950, %s47
        %p952 = scmp.lt.s32.totalorder %s951, 5
        %s953 = scalar_select %p952, %s951, 5
        %s954 = scalar_lea.vmem %s11, %s953
        %p955 = pneg %p371
        %p956 = pneg %p368
        %s957 = smul.u32 %s45, 2
        %s958 = sadd.s32 %s957, %s47
        %p959 = scmp.lt.s32.totalorder %s958, 5
        %s960 = scalar_select %p959, %s958, 5
        %s961 = scalar_lea.vmem %s12, %s960
        %p962 = pneg %p401
        %p963 = pneg %p398
        %s964 = smul.u32 %s45, 2
        %s965 = sadd.s32 %s964, %s47
        %p966 = scmp.lt.s32.totalorder %s965, 5
        %s967 = scalar_select %p966, %s965, 5
        %s968 = scalar_lea.vmem %s13, %s967
        %p969 = pneg %p431
        %p970 = pneg %p428
        %s971 = sand.u32 %s448, 1
        %s972 = scalar_lea.sflag [#allocation8], %s971
        %s973 = sand.u32 %s448, 1
        %s974 = smul.addr %s973, 16
        %s975 = scalar_lea.vmem [#allocation7], %s974
        %p976 = pneg %p461
        %p977 = pneg %p458
        %s978 = smul.u32 %s45, 2
        %s979 = sadd.s32 %s978, %s47
        %p980 = scmp.lt.s32.totalorder %s979, 5
        %s981 = scalar_select %p980, %s979, 5
        %s982 = scalar_lea.vmem %s15, %s981
        %p983 = pneg %p491
        %p984 = pneg %p488
        %s985 = smul.u32 %s45, 2
        %s986 = sadd.s32 %s985, %s47
        %p987 = scmp.lt.s32.totalorder %s986, 5
        %s988 = scalar_select %p987, %s986, 5
        %s989 = smul.addr %s988, 8
        %s990 = smul.addr %s989, 4
        %s991 = scalar_lea.vmem %s16, %s990
        %p992 = pneg %p521
        %p993 = pneg %p518
        %s994 = smul.u32 %s45, 2
        %s995 = sadd.s32 %s994, %s47
        %p996 = scmp.lt.s32.totalorder %s995, 5
        %s997 = scalar_select %p996, %s995, 5
        %s998 = scalar_lea.vmem %s17, %s997
        %p999 = pneg %p551
        %p1000 = pneg %p548
        %s1001 = smul.u32 %s45, 2
        %s1002 = sadd.s32 %s1001, %s47
        %p1003 = scmp.lt.s32.totalorder %s1002, 5
        %s1004 = scalar_select %p1003, %s1002, 5
        %s1005 = scalar_lea.vmem %s18, %s1004
        %p1006 = pneg %p581
        %p1007 = pneg %p578
        %s1008 = smul.u32 %s45, 2
        %s1009 = sadd.s32 %s1008, %s47
        %p1010 = scmp.lt.s32.totalorder %s1009, 5
        %s1011 = scalar_select %p1010, %s1009, 5
        %s1012 = scalar_lea.vmem %s19, %s1011
        %p1013 = pneg %p611
        %p1014 = pneg %p608
        %p1015 = pneg %p639
        %p1016 = pneg %p636
        %s1017 = sand.u32 %s626, 1
        %s1018 = scalar_lea.sflag [#allocation6], %s1017
        %s1019 = sand.u32 %s626, 1
        %s1020 = smul.addr %s1019, 8
        %s1021 = scalar_lea.vmem [#allocation9], %s1020
        %p1022 = scmp.lt.s32.totalorder %s46, 1
        %s1023 = scalar_select %p1022, %s46, 1
        %s1024 = smul.addr %s1023, 8
        %s1025 = scalar_lea.vmem %s0, %s1024
        %p1026 = scmp.lt.s32.totalorder %s46, 1
        %s1027 = scalar_select %p1026, %s46, 1
        %s1028 = smul.addr %s1027, 8
        %s1029 = scalar_lea.vmem %s1, %s1028
        %p1030 = scmp.lt.s32.totalorder %s46, 1
        %s1031 = scalar_select %p1030, %s46, 1
        %s1032 = smul.addr %s1031, 8
        %s1033 = scalar_lea.vmem %s2, %s1032
        %p1034 = scmp.lt.s32.totalorder %s46, 1
        %s1035 = scalar_select %p1034, %s46, 1
        %s1036 = scalar_lea.vmem %s3, %s1035
        %s1037 = smul.u32 %s45, 2
        %s1038 = sadd.s32 %s1037, %s47
        %p1039 = scmp.lt.s32.totalorder %s1038, 5
        %s1040 = scalar_select %p1039, %s1038, 5
        %s1041 = smul.addr %s1040, 4
        %s1042 = smul.addr %s1041, 4
        %s1043 = scalar_lea.vmem %s7, %s1042
        %s1044 = smul.u32 %s45, 2
        %s1045 = sadd.s32 %s1044, %s47
        %s1046 = smul.u32 %s45, 2
        %s1047 = sadd.s32 %s1046, %s47
        %p1048 = scmp.lt.s32.totalorder %s1047, 5
        %s1049 = scalar_select %p1048, %s1047, 5
        %s1050 = smul.addr %s1049, 4
        %s1051 = smul.addr %s1050, 4
        %s1052 = scalar_lea.vmem %s8, %s1051
        %s1053 = smul.u32 %s45, 2
        %s1054 = sadd.s32 %s1053, %s47
        %s1055 = smul.u32 %s45, 2
        %s1056 = sadd.s32 %s1055, %s47
        %p1057 = scmp.lt.s32.totalorder %s1056, 5
        %s1058 = scalar_select %p1057, %s1056, 5
        %s1059 = smul.addr %s1058, 4
        %s1060 = smul.addr %s1059, 4
        %s1061 = scalar_lea.vmem %s9, %s1060
        %s1062 = smul.u32 %s45, 2
        %s1063 = sadd.s32 %s1062, %s47
        %s1064 = smul.u32 %s45, 2
        %s1065 = sadd.s32 %s1064, %s47
        %s1066 = smul.u32 %s45, 2
        %s1067 = sadd.s32 %s1066, %s47
        %p1068 = scmp.lt.s32.totalorder %s1067, 5
        %s1069 = scalar_select %p1068, %s1067, 5
        %s1070 = scalar_lea.vmem %s11, %s1069
        %s1071 = smul.u32 %s45, 2
        %s1072 = sadd.s32 %s1071, %s47
        %s1073 = smul.u32 %s45, 2
        %s1074 = sadd.s32 %s1073, %s47
        %p1075 = scmp.lt.s32.totalorder %s1074, 5
        %s1076 = scalar_select %p1075, %s1074, 5
        %s1077 = scalar_lea.vmem %s12, %s1076
        %s1078 = smul.u32 %s45, 2
        %s1079 = sadd.s32 %s1078, %s47
        %s1080 = smul.u32 %s45, 2
        %s1081 = sadd.s32 %s1080, %s47
        %p1082 = scmp.lt.s32.totalorder %s1081, 5
        %s1083 = scalar_select %p1082, %s1081, 5
        %s1084 = scalar_lea.vmem %s13, %s1083
        %s1085 = smul.u32 %s45, 2
        %s1086 = sadd.s32 %s1085, %s47
        %s1087 = smul.u32 %s45, 2
        %s1088 = sadd.s32 %s1087, %s47
        %s1089 = smul.u32 %s45, 2
        %s1090 = sadd.s32 %s1089, %s47
        %p1091 = scmp.lt.s32.totalorder %s1090, 5
        %s1092 = scalar_select %p1091, %s1090, 5
        %s1093 = scalar_lea.vmem %s15, %s1092
        %s1094 = smul.u32 %s45, 2
        %s1095 = sadd.s32 %s1094, %s47
        %s1096 = smul.u32 %s45, 2
        %s1097 = sadd.s32 %s1096, %s47
        %p1098 = scmp.lt.s32.totalorder %s1097, 5
        %s1099 = scalar_select %p1098, %s1097, 5
        %s1100 = smul.addr %s1099, 8
        %s1101 = smul.addr %s1100, 4
        %s1102 = scalar_lea.vmem %s16, %s1101
        %s1103 = smul.u32 %s45, 2
        %s1104 = sadd.s32 %s1103, %s47
        %s1105 = smul.u32 %s45, 2
        %s1106 = sadd.s32 %s1105, %s47
        %p1107 = scmp.lt.s32.totalorder %s1106, 5
        %s1108 = scalar_select %p1107, %s1106, 5
        %s1109 = scalar_lea.vmem %s17, %s1108
        %s1110 = smul.u32 %s45, 2
        %s1111 = sadd.s32 %s1110, %s47
        %s1112 = smul.u32 %s45, 2
        %s1113 = sadd.s32 %s1112, %s47
        %p1114 = scmp.lt.s32.totalorder %s1113, 5
        %s1115 = scalar_select %p1114, %s1113, 5
        %s1116 = scalar_lea.vmem %s18, %s1115
        %s1117 = smul.u32 %s45, 2
        %s1118 = sadd.s32 %s1117, %s47
        %s1119 = smul.u32 %s45, 2
        %s1120 = sadd.s32 %s1119, %s47
        %p1121 = scmp.lt.s32.totalorder %s1120, 5
        %s1122 = scalar_select %p1121, %s1120, 5
        %s1123 = scalar_lea.vmem %s19, %s1122
        %s1124 = smul.u32 %s45, 2
        %s1125 = sadd.s32 %s1124, %s47
        %v1127 = vld [vmem:[%s1033] sm:$0xff]
        %p1128 = scmp.eq.s32.totalorder %s47, 0
        // Predicated region
        $region109: #{tpu_custom_call.1} parent=99 // pred_check
          %p1129 = pneg %p1128
        $region110: #{tpu_custom_call.1} parent=99 // pred_check_branch
          %1131 = sbr.rel (%p1129) target = $region112
        $region111: #{tpu_custom_call.1} parent=99 // pred_region
          %v1132 = vld [vmem:[%s1029] sm:$0xff]
          %v1133 = vld [vmem:[%s4] sm:$0x1]
          %1135 = vset.pattern.permute.xlu0 0
          %1136 = vperm.xlu0 %1135, %v1132
          %v1137 = vpop.permute.xlu0 %1136
          %v1140 = vperm.slane %v1133, 0
          %v1142 = vmul.f32 %v1137, %v1140
          %v1143 = vlaneseq
          %v1144 = vand.u32 %v1143, 127
          %vm1145 = vcmp.lt.s32.totalorder %v1144, 0
          %v1146 = vsub.s32 0, %v1144
          %v1147 = vsel %vm1145, %v1146, %v1144
          %v1148 = vshrl.u32 %v1147, 1
          %v1149 = vand.u32 %v1147, 1
          %v1150 = vsub.s32 0, %v1149
          %v1151 = vsel %vm1145, %v1150, %v1149
          %vm1152 = vcmp.ne.s32.totalorder %v1151, 0
          %vm1153 = vcmp.lt.s32.totalorder %v1151, 0
          %vm1154 = vmand %vm1153, %vm1152
          %v1155 = vadd.s32 %v1151, 2
          %v1156 = vsel %vm1154, %v1155, %v1151
          %vm1157 = vcmp.eq.s32.totalorder %v1156, 0
          %v1158 = vand.u32 2147483647, %v1142
          %vm1159 = vcmp.le.f32.partialorder %v1158, 0.7853982
          %vm1160 = vcmp.lt.s32.totalorder %v1142, 0
          %v1161 = vand.u32 %v1142, 2139095040
          %v1162 = vshrl.u32 %v1161, 23
          %v1163 = vsub.s32 %v1162, 127
          %v1164 = vand.u32 2147483647, %v1142
          %v1165 = vand.u32 %v1164, 8388607
          %v1166 = vor.u32 %v1165, 8388608
          %v1167 = vsub.s32 0, %v1166
          %v1168 = vadd.s32 %v1163, 1
          %vm1169 = vcmp.gt.s32.totalorder %v1168, 0
          %v1170 = vsel %vm1169, %v1168, 0
          %v1171 = vshrl.u32 %v1170, 5
          %v1172 = vand.u32 %v1170, 31
          %v1173 = vsub.s32 32, %v1172
          %v1174 = vshrl.u32 683565275, %v1173
          %v1175 = vshll.u32 683565275, %v1172
          %v1176 = vshrl.u32 2475754826, %v1173
          %v1177 = vor.u32 %v1175, %v1176
          %v1178 = vshll.u32 2475754826, %v1172
          %v1179 = vshrl.u32 2131351028, %v1173
          %v1180 = vor.u32 %v1178, %v1179
          %v1181 = vshll.u32 2131351028, %v1172
          %v1182 = vshrl.u32 2102212464, %v1173
          %v1183 = vor.u32 %v1181, %v1182
          %v1184 = vshll.u32 2102212464, %v1172
          %v1185 = vshrl.u32 920167782, %v1173
          %v1186 = vor.u32 %v1184, %v1185
          %v1187 = vshll.u32 920167782, %v1172
          %v1188 = vshrl.u32 1326507024, %v1173
          %v1189 = vor.u32 %v1187, %v1188
          %vm1190 = vcmp.lt.s32.totalorder %v1171, 1
          %vm1191 = vcmp.lt.s32.totalorder %v1171, 2
          %vm1192 = vcmp.lt.s32.totalorder %v1171, 3
          %vm1193 = vcmp.lt.s32.totalorder %v1171, 4
          %v1194 = vsel %vm1190, %v1174, %v1177
          %v1195 = vsel %vm1193, %v1183, 2102212464
          %v1196 = vsel %vm1192, %v1180, %v1195
          %v1197 = vsel %vm1191, %v1194, %v1196
          %v1198 = vsel %vm1190, %v1177, %v1180
          %v1199 = vsel %vm1193, %v1186, 920167782
          %v1200 = vsel %vm1192, %v1183, %v1199
          %v1201 = vsel %vm1191, %v1198, %v1200
          %v1202 = vsel %vm1190, %v1180, %v1183
          %v1203 = vsel %vm1193, %v1189, 1326507024
          %v1204 = vsel %vm1192, %v1186, %v1203
          %v1205 = vsel %vm1191, %v1202, %v1204
          %v1206 = vshll.u32 %v1166, 8
          %v1207 = vand.u32 %v1206, 65535
          %v1208 = vshrl.u32 %v1206, 16
          %v1209 = vand.u32 %v1205, 65535
          %v1210 = vshrl.u32 %v1205, 16
          %v1211 = vmul.u32 %v1207, %v1209
          %v1212 = vmul.u32 %v1207, %v1210
          %v1213 = vmul.u32 %v1208, %v1209
          %v1214 = vmul.u32 %v1208, %v1210
          %v1215 = vshll.u32 %v1212, 16
          %v1216 = vshrl.u32 %v1212, 16
          %v1217 = vshll.u32 %v1213, 16
          %v1218 = vshrl.u32 %v1213, 16
          %vm1219 = vc.u32 %v1211, %v1215
          %v1220 = vsel %vm1219, 1, 0
          %v1221 = vadd.s32 %v1211, %v1215
          %v1222 = vadd.s32 %v1214, %v1220
          %vm1223 = vc.u32 %v1221, %v1217
          %v1224 = vsel %vm1223, 1, 0
          %v1225 = vadd.s32 %v1221, %v1217
          %v1226 = vadd.s32 %v1222, %v1224
          %v1227 = vadd.s32 %v1226, %v1216
          %v1228 = vadd.s32 %v1227, %v1218
          %v1229 = vand.u32 %v1206, 65535
          %v1230 = vshrl.u32 %v1206, 16
          %v1231 = vand.u32 %v1201, 65535
          %v1232 = vshrl.u32 %v1201, 16
          %v1233 = vmul.u32 %v1229, %v1231
          %v1234 = vmul.u32 %v1229, %v1232
          %v1235 = vmul.u32 %v1230, %v1231
          %v1236 = vmul.u32 %v1230, %v1232
          %v1237 = vshll.u32 %v1234, 16
          %v1238 = vshrl.u32 %v1234, 16
          %v1239 = vshll.u32 %v1235, 16
          %v1240 = vshrl.u32 %v1235, 16
          %vm1241 = vc.u32 %v1233, %v1237
          %v1242 = vsel %vm1241, 1, 0
          %v1243 = vadd.s32 %v1233, %v1237
          %v1244 = vadd.s32 %v1236, %v1242
          %vm1245 = vc.u32 %v1243, %v1239
          %v1246 = vsel %vm1245, 1, 0
          %v1247 = vadd.s32 %v1243, %v1239
          %v1248 = vadd.s32 %v1244, %v1246
          %v1249 = vadd.s32 %v1248, %v1238
          %v1250 = vadd.s32 %v1249, %v1240
          %v1251 = vmul.u32 %v1206, %v1197
          %v1252 = vadd.s32 %v1228, %v1247
          %vm1253 = vc.u32 %v1228, %v1247
          %v1254 = vadd.s32 %v1250, 1
          %v1255 = vsel %vm1253, %v1254, %v1250
          %v1256 = vadd.s32 %v1251, %v1255
          %v1257 = vadd.s32 %v1256, 536870912
          %v1258 = vshrl.u32 %v1257, 30
          %v1259 = vshll.u32 %v1258, 30
          %v1260 = vsub.s32 %v1256, %v1259
          %vm1261 = vcmp.lt.s32.totalorder %v1260, 0
          %v1262 = vsub.s32 0, %v1260
          %v1263 = vsel %vm1261, %v1262, %v1260
          %v1264 = vclz %v1263
          %v1265 = vsub.s32 %v1264, 2
          %vm1266 = vcmp.gt.s32.totalorder 0, %v1265
          %v1267 = vsel %vm1266, 0, %v1265
          %v1268 = vsub.s32 32, %v1267
          %v1269 = vshll.u32 %v1260, %v1267
          %v1270 = vshrl.u32 %v1252, %v1268
          %v1271 = vor.u32 %v1269, %v1270
          %v1272 = vsub.s32 4294967266, %v1267
          %v1273 = vadd.s32 %v1272, 127
          %v1274 = vshll.u32 %v1273, 23
          %v1275 = vor.u32 4788187, %v1274
          %v1276 = vand.u32 2147483647, %v1275
          %v1278 = vcvt.s32.f32 %v1271
          %v1279 = vmul.f32 %v1278, %v1276
          %v1280 = vxor.u32 %v1279, 2147483648
          %v1281 = vsel %vm1160, %v1280, %v1279
          %v1282 = vsub.s32 4, %v1258
          %v1283 = vsel %vm1160, %v1282, %v1258
          %v1284 = vsel %vm1159, %v1142, %v1281
          %v1285 = vsel %vm1159, 0, %v1283
          %v1286 = vmul.f32 %v1284, %v1284
          %v1287 = vmul.f32 %v1286, -0.001358992
          %v1288 = vadd.f32 %v1287, 0.041655596
          %v1289 = vmul.f32 %v1286, %v1288
          %v1290 = vadd.f32 %v1289, -0.4999988
          %v1291 = vmul.f32 %v1286, %v1290
          %v1292 = vadd.f32 1.0, %v1291
          %v1293 = vmul.f32 %v1284, %v1284
          %v1294 = vmul.f32 %v1293, -0.00019511016
          %v1295 = vadd.f32 %v1294, 0.008332121
          %v1296 = vmul.f32 %v1293, %v1295
          %v1297 = vadd.f32 %v1296, -0.16666654
          %v1298 = vmul.f32 %v1293, %v1297
          %v1299 = vadd.f32 %v1298, 1.0
          %v1300 = vmul.f32 %v1299, %v1284
          %vm1301 = vweird.f32 %v1142
          %v1302 = vadd.s32 %v1285, 3
          %v1303 = vand.u32 %v1302, 3
          %vm1304 = vcmp.lt.s32.totalorder %v1303, 2
          %vm1305 = vcmp.eq.s32.totalorder %v1303, 0
          %v1306 = vxor.u32 %v1300, 2147483648
          %v1307 = vsel %vm1305, %v1292, %v1306
          %vm1308 = vcmp.eq.s32.totalorder %v1303, 2
          %v1309 = vxor.u32 %v1292, 2147483648
          %v1310 = vsel %vm1308, %v1309, %v1300
          %v1311 = vsel %vm1304, %v1307, %v1310
          %v1312 = vsel %vm1301, nan, %v1311
          %v1313 = vand.u32 2147483647, %v1142
          %vm1314 = vcmp.le.f32.partialorder %v1313, 0.7853982
          %vm1315 = vcmp.lt.s32.totalorder %v1142, 0
          %v1316 = vand.u32 %v1142, 2139095040
          %v1317 = vshrl.u32 %v1316, 23
          %v1318 = vsub.s32 %v1317, 127
          %v1319 = vand.u32 2147483647, %v1142
          %v1320 = vand.u32 %v1319, 8388607
          %v1321 = vor.u32 %v1320, 8388608
          %v1322 = vsub.s32 0, %v1321
          %v1323 = vadd.s32 %v1318, 1
          %vm1324 = vcmp.gt.s32.totalorder %v1323, 0
          %v1325 = vsel %vm1324, %v1323, 0
          %v1326 = vshrl.u32 %v1325, 5
          %v1327 = vand.u32 %v1325, 31
          %v1328 = vsub.s32 32, %v1327
          %v1329 = vshrl.u32 683565275, %v1328
          %v1330 = vshll.u32 683565275, %v1327
          %v1331 = vshrl.u32 2475754826, %v1328
          %v1332 = vor.u32 %v1330, %v1331
          %v1333 = vshll.u32 2475754826, %v1327
          %v1334 = vshrl.u32 2131351028, %v1328
          %v1335 = vor.u32 %v1333, %v1334
          %v1336 = vshll.u32 2131351028, %v1327
          %v1337 = vshrl.u32 2102212464, %v1328
          %v1338 = vor.u32 %v1336, %v1337
          %v1339 = vshll.u32 2102212464, %v1327
          %v1340 = vshrl.u32 920167782, %v1328
          %v1341 = vor.u32 %v1339, %v1340
          %v1342 = vshll.u32 920167782, %v1327
          %v1343 = vshrl.u32 1326507024, %v1328
          %v1344 = vor.u32 %v1342, %v1343
          %vm1345 = vcmp.lt.s32.totalorder %v1326, 1
          %vm1346 = vcmp.lt.s32.totalorder %v1326, 2
          %vm1347 = vcmp.lt.s32.totalorder %v1326, 3
          %vm1348 = vcmp.lt.s32.totalorder %v1326, 4
          %v1349 = vsel %vm1345, %v1329, %v1332
          %v1350 = vsel %vm1348, %v1338, 2102212464
          %v1351 = vsel %vm1347, %v1335, %v1350
          %v1352 = vsel %vm1346, %v1349, %v1351
          %v1353 = vsel %vm1345, %v1332, %v1335
          %v1354 = vsel %vm1348, %v1341, 920167782
          %v1355 = vsel %vm1347, %v1338, %v1354
          %v1356 = vsel %vm1346, %v1353, %v1355
          %v1357 = vsel %vm1345, %v1335, %v1338
          %v1358 = vsel %vm1348, %v1344, 1326507024
          %v1359 = vsel %vm1347, %v1341, %v1358
          %v1360 = vsel %vm1346, %v1357, %v1359
          %v1361 = vshll.u32 %v1321, 8
          %v1362 = vand.u32 %v1361, 65535
          %v1363 = vshrl.u32 %v1361, 16
          %v1364 = vand.u32 %v1360, 65535
          %v1365 = vshrl.u32 %v1360, 16
          %v1366 = vmul.u32 %v1362, %v1364
          %v1367 = vmul.u32 %v1362, %v1365
          %v1368 = vmul.u32 %v1363, %v1364
          %v1369 = vmul.u32 %v1363, %v1365
          %v1370 = vshll.u32 %v1367, 16
          %v1371 = vshrl.u32 %v1367, 16
          %v1372 = vshll.u32 %v1368, 16
          %v1373 = vshrl.u32 %v1368, 16
          %vm1374 = vc.u32 %v1366, %v1370
          %v1375 = vsel %vm1374, 1, 0
          %v1376 = vadd.s32 %v1366, %v1370
          %v1377 = vadd.s32 %v1369, %v1375
          %vm1378 = vc.u32 %v1376, %v1372
          %v1379 = vsel %vm1378, 1, 0
          %v1380 = vadd.s32 %v1376, %v1372
          %v1381 = vadd.s32 %v1377, %v1379
          %v1382 = vadd.s32 %v1381, %v1371
          %v1383 = vadd.s32 %v1382, %v1373
          %v1384 = vand.u32 %v1361, 65535
          %v1385 = vshrl.u32 %v1361, 16
          %v1386 = vand.u32 %v1356, 65535
          %v1387 = vshrl.u32 %v1356, 16
          %v1388 = vmul.u32 %v1384, %v1386
          %v1389 = vmul.u32 %v1384, %v1387
          %v1390 = vmul.u32 %v1385, %v1386
          %v1391 = vmul.u32 %v1385, %v1387
          %v1392 = vshll.u32 %v1389, 16
          %v1393 = vshrl.u32 %v1389, 16
          %v1394 = vshll.u32 %v1390, 16
          %v1395 = vshrl.u32 %v1390, 16
          %vm1396 = vc.u32 %v1388, %v1392
          %v1397 = vsel %vm1396, 1, 0
          %v1398 = vadd.s32 %v1388, %v1392
          %v1399 = vadd.s32 %v1391, %v1397
          %vm1400 = vc.u32 %v1398, %v1394
          %v1401 = vsel %vm1400, 1, 0
          %v1402 = vadd.s32 %v1398, %v1394
          %v1403 = vadd.s32 %v1399, %v1401
          %v1404 = vadd.s32 %v1403, %v1393
          %v1405 = vadd.s32 %v1404, %v1395
          %v1406 = vmul.u32 %v1361, %v1352
          %v1407 = vadd.s32 %v1383, %v1402
          %vm1408 = vc.u32 %v1383, %v1402
          %v1409 = vadd.s32 %v1405, 1
          %v1410 = vsel %vm1408, %v1409, %v1405
          %v1411 = vadd.s32 %v1406, %v1410
          %v1412 = vadd.s32 %v1411, 536870912
          %v1413 = vshrl.u32 %v1412, 30
          %v1414 = vshll.u32 %v1413, 30
          %v1415 = vsub.s32 %v1411, %v1414
          %vm1416 = vcmp.lt.s32.totalorder %v1415, 0
          %v1417 = vsub.s32 0, %v1415
          %v1418 = vsel %vm1416, %v1417, %v1415
          %v1419 = vclz %v1418
          %v1420 = vsub.s32 %v1419, 2
          %vm1421 = vcmp.gt.s32.totalorder 0, %v1420
          %v1422 = vsel %vm1421, 0, %v1420
          %v1423 = vsub.s32 32, %v1422
          %v1424 = vshll.u32 %v1415, %v1422
          %v1425 = vshrl.u32 %v1407, %v1423
          %v1426 = vor.u32 %v1424, %v1425
          %v1427 = vsub.s32 4294967266, %v1422
          %v1428 = vadd.s32 %v1427, 127
          %v1429 = vshll.u32 %v1428, 23
          %v1430 = vor.u32 4788187, %v1429
          %v1431 = vand.u32 2147483647, %v1430
          %v1433 = vcvt.s32.f32 %v1426
          %v1434 = vmul.f32 %v1433, %v1431
          %v1435 = vxor.u32 %v1434, 2147483648
          %v1436 = vsel %vm1315, %v1435, %v1434
          %v1437 = vsub.s32 4, %v1413
          %v1438 = vsel %vm1315, %v1437, %v1413
          %v1439 = vsel %vm1314, %v1142, %v1436
          %v1440 = vsel %vm1314, 0, %v1438
          %v1441 = vmul.f32 %v1439, %v1439
          %v1442 = vmul.f32 %v1441, -0.001358992
          %v1443 = vadd.f32 %v1442, 0.041655596
          %v1444 = vmul.f32 %v1441, %v1443
          %v1445 = vadd.f32 %v1444, -0.4999988
          %v1446 = vmul.f32 %v1441, %v1445
          %v1447 = vadd.f32 1.0, %v1446
          %v1448 = vmul.f32 %v1439, %v1439
          %v1449 = vmul.f32 %v1448, -0.00019511016
          %v1450 = vadd.f32 %v1449, 0.008332121
          %v1451 = vmul.f32 %v1448, %v1450
          %v1452 = vadd.f32 %v1451, -0.16666654
          %v1453 = vmul.f32 %v1448, %v1452
          %v1454 = vadd.f32 %v1453, 1.0
          %v1455 = vmul.f32 %v1454, %v1439
          %vm1456 = vweird.f32 %v1142
          %v1457 = vand.u32 %v1440, 3
          %vm1458 = vcmp.lt.s32.totalorder %v1457, 2
          %vm1459 = vcmp.eq.s32.totalorder %v1457, 0
          %v1460 = vxor.u32 %v1455, 2147483648
          %v1461 = vsel %vm1459, %v1447, %v1460
          %vm1462 = vcmp.eq.s32.totalorder %v1457, 2
          %v1463 = vxor.u32 %v1447, 2147483648
          %v1464 = vsel %vm1462, %v1463, %v1455
          %v1465 = vsel %vm1458, %v1461, %v1464
          %v1466 = vsel %vm1456, nan, %v1465
          %v1467 = vsel %vm1157, %v1312, %v1466
          %1469 = vset.pattern.permute.xlu0 0
          %1470 = vperm.xlu0 %1469, %v1127
          %v1471 = vpop.permute.xlu0 %1470
          %v1473 = vmul.f32 %v1467, %v1471
          %v1474 = vld [vmem:[%s1025] sm:$0xff]
          %v1475 = vld [vmem:[%s5] sm:$0xf]
          %v1476 = vld [vmem:[%s6] sm:$0x1]
          %v1478 = vperm.slane %v1476, 0
          %vm1480 = vcmask 31744
          %v1482 = vsel %vm1480, %v1474, 0
          %vm1484 = vcmask 1043456
          %v1486 = vsel %vm1484, %v1475, 0
          %1488 = vmatpush.msra.mxu0 0.0
          %1489 = vmatpush.msra.mxu0 0.0
          %1490 = vmatpush.msra.mxu0 0.0
          %1491 = vmatpush.msra.mxu0 0.0
          %1492 = vmatpush.msra.mxu0 0.0
          %1493 = vmatpush.msra.mxu0 0.0
          %1494 = vmatpush.msra.mxu0 0.0
          %1495 = vmatpush.msra.mxu0 0.0
          %1496 = vmatpush.msra.mxu0 0.0
          %1497 = vmatpush.msra.mxu0 0.0
          %1498 = vmatpush.msra.mxu0 0.0
          %1499 = vmatpush.msra.mxu0 0.0
          %1500 = vmatpush.msra.mxu0 0.0
          %1501 = vmatpush.msra.mxu0 0.0
          %1502 = vmatpush.msra.mxu0 0.0
          %1503 = vmatpush.msra.mxu0 %v1486
          %1504 = vmatmul.f32.gmra.mxu0 %v1482
          %v1505 = vpop.f32.mrf.mxu0
          %v1506 = vadd.f32 %v1478, %v1505
          %1507 = vdwg.mxu0
          %v1508 = vmax.f32 %v1506, 0.0
          %p1509 = scmp.eq.s32.totalorder %s45, 2
          %s1510 = scalar_select %p1509, 0.0, 1.0
          %p1511 = scmp.eq.s32.totalorder %s45, 1
          %s1512 = scalar_select %p1511, 0.0, 1.0
          %v1513 = vstv %s1510
          %v1514 = vmul.f32 %v1513, %v1473
          %v1515 = vstv %s1512
          %v1516 = vmul.f32 %v1515, %v1508
          %v1517 = vadd.f32 %v1514, %v1516
          %vm1518 = vcmask 261120
          %1519 = vst.msk [vmem:[#allocation2] sm:$0xff] %vm1518, %v1517
          %v1520 = vlaneseq
          %v1521 = vshrl.u32 %v1520, 7
          %vm1522 = vcmp.gt.s32.totalorder %v1144, %v1521
          %v1523 = vsel %vm1522, 1, 0
          %v1524 = vcvt.s32.f32 %v1523
          %v1525 = vld [vmem:[%s1036] sm:$0x1]
          %v1527 = vperm.slane %v1525, 0
          %v1529 = vmax.f32 %v1524, %v1527
          %vm1530 = vcmask 64512
          %1531 = vst.msk [vmem:[#allocation3] sm:$0xff] %vm1530, %v1529
        $region112: #{tpu_custom_call.1} parent=99 // pred_fallthru
          _
        %v1532 = vld [vmem:[#allocation2] sm:$0xff]
        %v1533 = vpack.c.bf16 %v1532, %v1532
        %v1534 = vld [vmem:[%s1043] sm:$0xf]
        %v1535 = vld [vmem:[%s1043 + $0x4] sm:$0xf]
        %v1536 = vld [vmem:[%s1043 + $0x8] sm:$0xf]
        %v1537 = vld [vmem:[%s1043 + $0xc] sm:$0xf]
        %vm1538 = vcmask 261120
        %v1540 = vsel %vm1538, %v1533, 0
        %v1543 = vsel %vm1538, %v1534, 0
        %1545 = vmatpush.bf16.xpose.msra.mxu0 0
        %1546 = vmatpush.bf16.xpose.msra.mxu0 0
        %1547 = vmatpush.bf16.xpose.msra.mxu0 0
        %1548 = vmatpush.bf16.xpose.msra.mxu0 0
        %1549 = vmatpush.bf16.xpose.msra.mxu0 0
        %1550 = vmatpush.bf16.xpose.msra.mxu0 0
        %1551 = vmatpush.bf16.xpose.msra.mxu0 0
        %1552 = vmatpush.bf16.xpose.msra.mxu0 %v1543
        %1553 = vmatmul.bf16.gmra.mxu0 %v1540
        %v1554 = vpop.f32.mrf.mxu0
        %v1555 = vadd.f32 0.0, %v1554
        %v1556 = vpop.f32.mrf.mxu0
        %1557 = vdwg.mxu0
        %v1559 = vsel %vm1538, %v1535, 0
        %1561 = vmatpush.bf16.xpose.msra.mxu0 0
        %1562 = vmatpush.bf16.xpose.msra.mxu0 0
        %1563 = vmatpush.bf16.xpose.msra.mxu0 0
        %1564 = vmatpush.bf16.xpose.msra.mxu0 0
        %1565 = vmatpush.bf16.xpose.msra.mxu0 0
        %1566 = vmatpush.bf16.xpose.msra.mxu0 0
        %1567 = vmatpush.bf16.xpose.msra.mxu0 0
        %1568 = vmatpush.bf16.xpose.msra.mxu0 %v1559
        %1569 = vmatmul.bf16.gmra.mxu0 %v1540
        %v1570 = vpop.f32.mrf.mxu0
        %v1571 = vadd.f32 0.0, %v1570
        %v1572 = vpop.f32.mrf.mxu0
        %1573 = vdwg.mxu0
        %v1575 = vsel %vm1538, %v1536, 0
        %1577 = vmatpush.bf16.xpose.msra.mxu0 0
        %1578 = vmatpush.bf16.xpose.msra.mxu0 0
        %1579 = vmatpush.bf16.xpose.msra.mxu0 0
        %1580 = vmatpush.bf16.xpose.msra.mxu0 0
        %1581 = vmatpush.bf16.xpose.msra.mxu0 0
        %1582 = vmatpush.bf16.xpose.msra.mxu0 0
        %1583 = vmatpush.bf16.xpose.msra.mxu0 0
        %1584 = vmatpush.bf16.xpose.msra.mxu0 %v1575
        %1585 = vmatmul.bf16.gmra.mxu0 %v1540
        %v1586 = vpop.f32.mrf.mxu0
        %v1587 = vadd.f32 0.0, %v1586
        %v1588 = vpop.f32.mrf.mxu0
        %1589 = vdwg.mxu0
        %v1591 = vsel %vm1538, %v1537, 0
        %1593 = vmatpush.bf16.xpose.msra.mxu0 0
        %1594 = vmatpush.bf16.xpose.msra.mxu0 0
        %1595 = vmatpush.bf16.xpose.msra.mxu0 0
        %1596 = vmatpush.bf16.xpose.msra.mxu0 0
        %1597 = vmatpush.bf16.xpose.msra.mxu0 0
        %1598 = vmatpush.bf16.xpose.msra.mxu0 0
        %1599 = vmatpush.bf16.xpose.msra.mxu0 0
        %1600 = vmatpush.bf16.xpose.msra.mxu0 %v1591
        %1601 = vmatmul.bf16.gmra.mxu0 %v1540
        %v1602 = vpop.f32.mrf.mxu0
        %v1603 = vadd.f32 0.0, %v1602
        %v1604 = vpop.f32.mrf.mxu0
        %1605 = vdwg.mxu0
        %v1606 = vld [vmem:[%s1052] sm:$0xf]
        %v1607 = vld [vmem:[%s1052 + $0x4] sm:$0xf]
        %v1608 = vld [vmem:[%s1052 + $0x8] sm:$0xf]
        %v1609 = vld [vmem:[%s1052 + $0xc] sm:$0xf]
        %v1611 = vsel %vm1538, %v1606, 0
        %1613 = vmatpush.bf16.xpose.msra.mxu0 0
        %1614 = vmatpush.bf16.xpose.msra.mxu0 0
        %1615 = vmatpush.bf16.xpose.msra.mxu0 0
        %1616 = vmatpush.bf16.xpose.msra.mxu0 0
        %1617 = vmatpush.bf16.xpose.msra.mxu0 0
        %1618 = vmatpush.bf16.xpose.msra.mxu0 0
        %1619 = vmatpush.bf16.xpose.msra.mxu0 0
        %1620 = vmatpush.bf16.xpose.msra.mxu0 %v1611
        %1621 = vmatmul.bf16.gmra.mxu0 %v1540
        %v1622 = vpop.f32.mrf.mxu0
        %v1623 = vadd.f32 0.0, %v1622
        %v1624 = vpop.f32.mrf.mxu0
        %1625 = vdwg.mxu0
        %v1627 = vsel %vm1538, %v1607, 0
        %1629 = vmatpush.bf16.xpose.msra.mxu0 0
        %1630 = vmatpush.bf16.xpose.msra.mxu0 0
        %1631 = vmatpush.bf16.xpose.msra.mxu0 0
        %1632 = vmatpush.bf16.xpose.msra.mxu0 0
        %1633 = vmatpush.bf16.xpose.msra.mxu0 0
        %1634 = vmatpush.bf16.xpose.msra.mxu0 0
        %1635 = vmatpush.bf16.xpose.msra.mxu0 0
        %1636 = vmatpush.bf16.xpose.msra.mxu0 %v1627
        %1637 = vmatmul.bf16.gmra.mxu0 %v1540
        %v1638 = vpop.f32.mrf.mxu0
        %v1639 = vadd.f32 0.0, %v1638
        %v1640 = vpop.f32.mrf.mxu0
        %1641 = vdwg.mxu0
        %v1643 = vsel %vm1538, %v1608, 0
        %1645 = vmatpush.bf16.xpose.msra.mxu0 0
        %1646 = vmatpush.bf16.xpose.msra.mxu0 0
        %1647 = vmatpush.bf16.xpose.msra.mxu0 0
        %1648 = vmatpush.bf16.xpose.msra.mxu0 0
        %1649 = vmatpush.bf16.xpose.msra.mxu0 0
        %1650 = vmatpush.bf16.xpose.msra.mxu0 0
        %1651 = vmatpush.bf16.xpose.msra.mxu0 0
        %1652 = vmatpush.bf16.xpose.msra.mxu0 %v1643
        %1653 = vmatmul.bf16.gmra.mxu0 %v1540
        %v1654 = vpop.f32.mrf.mxu0
        %v1655 = vadd.f32 0.0, %v1654
        %v1656 = vpop.f32.mrf.mxu0
        %1657 = vdwg.mxu0
        %v1659 = vsel %vm1538, %v1609, 0
        %1661 = vmatpush.bf16.xpose.msra.mxu0 0
        %1662 = vmatpush.bf16.xpose.msra.mxu0 0
        %1663 = vmatpush.bf16.xpose.msra.mxu0 0
        %1664 = vmatpush.bf16.xpose.msra.mxu0 0
        %1665 = vmatpush.bf16.xpose.msra.mxu0 0
        %1666 = vmatpush.bf16.xpose.msra.mxu0 0
        %1667 = vmatpush.bf16.xpose.msra.mxu0 0
        %1668 = vmatpush.bf16.xpose.msra.mxu0 %v1659
        %1669 = vmatmul.bf16.gmra.mxu0 %v1540
        %v1670 = vpop.f32.mrf.mxu0
        %v1671 = vadd.f32 0.0, %v1670
        %v1672 = vpop.f32.mrf.mxu0
        %1673 = vdwg.mxu0
        %v1674 = vld [vmem:[%s1061] sm:$0xf]
        %v1675 = vld [vmem:[%s1061 + $0x4] sm:$0xf]
        %v1676 = vld [vmem:[%s1061 + $0x8] sm:$0xf]
        %v1677 = vld [vmem:[%s1061 + $0xc] sm:$0xf]
        %v1679 = vsel %vm1538, %v1674, 0
        %1681 = vmatpush.bf16.xpose.msra.mxu0 0
        %1682 = vmatpush.bf16.xpose.msra.mxu0 0
        %1683 = vmatpush.bf16.xpose.msra.mxu0 0
        %1684 = vmatpush.bf16.xpose.msra.mxu0 0
        %1685 = vmatpush.bf16.xpose.msra.mxu0 0
        %1686 = vmatpush.bf16.xpose.msra.mxu0 0
        %1687 = vmatpush.bf16.xpose.msra.mxu0 0
        %1688 = vmatpush.bf16.xpose.msra.mxu0 %v1679
        %1689 = vmatmul.bf16.gmra.mxu0 %v1540
        %v1690 = vpop.f32.mrf.mxu0
        %v1691 = vadd.f32 0.0, %v1690
        %v1692 = vpop.f32.mrf.mxu0
        %1693 = vdwg.mxu0
        %v1695 = vsel %vm1538, %v1675, 0
        %1697 = vmatpush.bf16.xpose.msra.mxu0 0
        %1698 = vmatpush.bf16.xpose.msra.mxu0 0
        %1699 = vmatpush.bf16.xpose.msra.mxu0 0
        %1700 = vmatpush.bf16.xpose.msra.mxu0 0
        %1701 = vmatpush.bf16.xpose.msra.mxu0 0
        %1702 = vmatpush.bf16.xpose.msra.mxu0 0
        %1703 = vmatpush.bf16.xpose.msra.mxu0 0
        %1704 = vmatpush.bf16.xpose.msra.mxu0 %v1695
        %1705 = vmatmul.bf16.gmra.mxu0 %v1540
        %v1706 = vpop.f32.mrf.mxu0
        %v1707 = vadd.f32 0.0, %v1706
        %v1708 = vpop.f32.mrf.mxu0
        %1709 = vdwg.mxu0
        %v1711 = vsel %vm1538, %v1676, 0
        %1713 = vmatpush.bf16.xpose.msra.mxu0 0
        %1714 = vmatpush.bf16.xpose.msra.mxu0 0
        %1715 = vmatpush.bf16.xpose.msra.mxu0 0
        %1716 = vmatpush.bf16.xpose.msra.mxu0 0
        %1717 = vmatpush.bf16.xpose.msra.mxu0 0
        %1718 = vmatpush.bf16.xpose.msra.mxu0 0
        %1719 = vmatpush.bf16.xpose.msra.mxu0 0
        %1720 = vmatpush.bf16.xpose.msra.mxu0 %v1711
        %1721 = vmatmul.bf16.gmra.mxu0 %v1540
        %v1722 = vpop.f32.mrf.mxu0
        %v1723 = vadd.f32 0.0, %v1722
        %v1724 = vpop.f32.mrf.mxu0
        %1725 = vdwg.mxu0
        %v1727 = vsel %vm1538, %v1677, 0
        %1729 = vmatpush.bf16.xpose.msra.mxu0 0
        %1730 = vmatpush.bf16.xpose.msra.mxu0 0
        %1731 = vmatpush.bf16.xpose.msra.mxu0 0
        %1732 = vmatpush.bf16.xpose.msra.mxu0 0
        %1733 = vmatpush.bf16.xpose.msra.mxu0 0
        %1734 = vmatpush.bf16.xpose.msra.mxu0 0
        %1735 = vmatpush.bf16.xpose.msra.mxu0 0
        %1736 = vmatpush.bf16.xpose.msra.mxu0 %v1727
        %1737 = vmatmul.bf16.gmra.mxu0 %v1540
        %v1738 = vpop.f32.mrf.mxu0
        %v1739 = vadd.f32 0.0, %v1738
        %v1740 = vpop.f32.mrf.mxu0
        %1741 = vdwg.mxu0
        %v1742 = vpack.c.bf16 %v1555, %v1555
        %v1743 = vpack.c.bf16 %v1571, %v1571
        %v1744 = vpack.c.bf16 %v1587, %v1587
        %v1745 = vpack.c.bf16 %v1603, %v1603
        %v1746 = vpack.c.bf16 %v1623, %v1623
        %v1747 = vpack.c.bf16 %v1639, %v1639
        %v1748 = vpack.c.bf16 %v1655, %v1655
        %v1749 = vpack.c.bf16 %v1671, %v1671
        %vm1750 = vcmask 64512
        %v1752 = vsel %vm1750, %v1742, 0
        %v1755 = vsel %vm1750, %v1746, 0
        %1757 = vmatpush.bf16.xpose.msra.mxu0 0
        %1758 = vmatpush.bf16.xpose.msra.mxu0 0
        %1759 = vmatpush.bf16.xpose.msra.mxu0 0
        %1760 = vmatpush.bf16.xpose.msra.mxu0 0
        %1761 = vmatpush.bf16.xpose.msra.mxu0 0
        %1762 = vmatpush.bf16.xpose.msra.mxu0 0
        %1763 = vmatpush.bf16.xpose.msra.mxu0 0
        %1764 = vmatpush.bf16.xpose.msra.mxu0 %v1755
        %1765 = vmatmul.bf16.gmra.mxu0 %v1752
        %v1766 = vpop.f32.mrf.mxu0
        %v1767 = vadd.f32 0.0, %v1766
        %v1768 = vpop.f32.mrf.mxu0
        %1769 = vdwg.mxu0
        %v1771 = vsel %vm1750, %v1743, 0
        %v1774 = vsel %vm1750, %v1747, 0
        %1776 = vmatpush.bf16.xpose.msra.mxu0 0
        %1777 = vmatpush.bf16.xpose.msra.mxu0 0
        %1778 = vmatpush.bf16.xpose.msra.mxu0 0
        %1779 = vmatpush.bf16.xpose.msra.mxu0 0
        %1780 = vmatpush.bf16.xpose.msra.mxu0 0
        %1781 = vmatpush.bf16.xpose.msra.mxu0 0
        %1782 = vmatpush.bf16.xpose.msra.mxu0 0
        %1783 = vmatpush.bf16.xpose.msra.mxu0 %v1774
        %1784 = vmatmul.bf16.gmra.mxu0 %v1771
        %v1785 = vpop.f32.mrf.mxu0
        %v1786 = vadd.f32 0.0, %v1785
        %v1787 = vpop.f32.mrf.mxu0
        %1788 = vdwg.mxu0
        %v1790 = vsel %vm1750, %v1744, 0
        %v1793 = vsel %vm1750, %v1748, 0
        %1795 = vmatpush.bf16.xpose.msra.mxu0 0
        %1796 = vmatpush.bf16.xpose.msra.mxu0 0
        %1797 = vmatpush.bf16.xpose.msra.mxu0 0
        %1798 = vmatpush.bf16.xpose.msra.mxu0 0
        %1799 = vmatpush.bf16.xpose.msra.mxu0 0
        %1800 = vmatpush.bf16.xpose.msra.mxu0 0
        %1801 = vmatpush.bf16.xpose.msra.mxu0 0
        %1802 = vmatpush.bf16.xpose.msra.mxu0 %v1793
        %1803 = vmatmul.bf16.gmra.mxu0 %v1790
        %v1804 = vpop.f32.mrf.mxu0
        %v1805 = vadd.f32 0.0, %v1804
        %v1806 = vpop.f32.mrf.mxu0
        %1807 = vdwg.mxu0
        %v1809 = vsel %vm1750, %v1745, 0
        %v1812 = vsel %vm1750, %v1749, 0
        %1814 = vmatpush.bf16.xpose.msra.mxu0 0
        %1815 = vmatpush.bf16.xpose.msra.mxu0 0
        %1816 = vmatpush.bf16.xpose.msra.mxu0 0
        %1817 = vmatpush.bf16.xpose.msra.mxu0 0
        %1818 = vmatpush.bf16.xpose.msra.mxu0 0
        %1819 = vmatpush.bf16.xpose.msra.mxu0 0
        %1820 = vmatpush.bf16.xpose.msra.mxu0 0
        %1821 = vmatpush.bf16.xpose.msra.mxu0 %v1812
        %1822 = vmatmul.bf16.gmra.mxu0 %v1809
        %v1823 = vpop.f32.mrf.mxu0
        %v1824 = vadd.f32 0.0, %v1823
        %v1825 = vpop.f32.mrf.mxu0
        %1826 = vdwg.mxu0
        %v1827 = vld [vmem:[#allocation3] sm:$0xff]
        %v1828 = vsub.f32 1.0, %v1827
        %v1829 = vmul.f32 %v1767, %v1828
        %v1830 = vmul.f32 %v1786, %v1828
        %v1831 = vmul.f32 %v1805, %v1828
        %v1832 = vmul.f32 %v1824, %v1828
        %v1833 = vmul.f32 %v1827, -1e+09
        %v1834 = vadd.f32 %v1829, %v1833
        %v1835 = vadd.f32 %v1830, %v1833
        %v1836 = vadd.f32 %v1831, %v1833
        %v1837 = vadd.f32 %v1832, %v1833
        %v1838 = vsel %vm1750, %v1834, -inf
        %1839 = vmax.xlane.f32.xlu0 %v1838
        %v1840 = vpop.xlane.xlu0 %1839
        %v1841 = vsel %vm1750, %v1835, -inf
        %1842 = vmax.xlane.f32.xlu0 %v1841
        %v1843 = vpop.xlane.xlu0 %1842
        %v1844 = vsel %vm1750, %v1836, -inf
        %1845 = vmax.xlane.f32.xlu0 %v1844
        %v1846 = vpop.xlane.xlu0 %1845
        %v1847 = vsel %vm1750, %v1837, -inf
        %1848 = vmax.xlane.f32.xlu0 %v1847
        %v1849 = vpop.xlane.xlu0 %1848
        %v1850 = vsub.f32 %v1834, %v1840
        %v1851 = vsub.f32 %v1835, %v1843
        %v1852 = vsub.f32 %v1836, %v1846
        %v1853 = vsub.f32 %v1837, %v1849
        %v1854 = vmul.f32 %v1850, 1.442695
        %v1855 = vpow.pop %v1854
        %v1856 = vmul.f32 %v1851, 1.442695
        %v1857 = vpow.pop %v1856
        %v1858 = vmul.f32 %v1852, 1.442695
        %v1859 = vpow.pop %v1858
        %v1860 = vmul.f32 %v1853, 1.442695
        %v1861 = vpow.pop %v1860
        %v1862 = vsel %vm1750, %v1855, 0.0
        %1863 = vadd.xlane.f32.xlu0 %v1862
        %v1864 = vpop.xlane.xlu0 %1863
        %v1865 = vsel %vm1750, %v1857, 0.0
        %1866 = vadd.xlane.f32.xlu0 %v1865
        %v1867 = vpop.xlane.xlu0 %1866
        %v1868 = vsel %vm1750, %v1859, 0.0
        %1869 = vadd.xlane.f32.xlu0 %v1868
        %v1870 = vpop.xlane.xlu0 %1869
        %v1871 = vsel %vm1750, %v1861, 0.0
        %1872 = vadd.xlane.f32.xlu0 %v1871
        %v1873 = vpop.xlane.xlu0 %1872
        %v1874 = vrcp.pop %v1864
        %v1875 = vrcp.pop %v1867
        %v1876 = vrcp.pop %v1870
        %v1877 = vrcp.pop %v1873
        %v1878 = vmul.f32 %v1855, %v1874
        %v1879 = vmul.f32 %v1857, %v1875
        %v1880 = vmul.f32 %v1859, %v1876
        %v1881 = vmul.f32 %v1861, %v1877
        %v1882 = vpack.c.bf16 %v1878, %v1878
        %v1883 = vpack.c.bf16 %v1879, %v1879
        %v1884 = vpack.c.bf16 %v1880, %v1880
        %v1885 = vpack.c.bf16 %v1881, %v1881
        %v1886 = vpack.c.bf16 %v1691, %v1691
        %v1887 = vpack.c.bf16 %v1707, %v1707
        %v1888 = vpack.c.bf16 %v1723, %v1723
        %v1889 = vpack.c.bf16 %v1739, %v1739
        %v1891 = vsel %vm1750, %v1882, 0
        %vm1893 = vcmask 1043456
        %v1895 = vsel %vm1893, %v1886, 0
        %1897 = vmatpush.bf16.msra.mxu0 0
        %1898 = vmatpush.bf16.msra.mxu0 0
        %1899 = vmatpush.bf16.msra.mxu0 0
        %1900 = vmatpush.bf16.msra.mxu0 0
        %1901 = vmatpush.bf16.msra.mxu0 0
        %1902 = vmatpush.bf16.msra.mxu0 0
        %1903 = vmatpush.bf16.msra.mxu0 0
        %1904 = vmatpush.bf16.msra.mxu0 %v1895
        %1905 = vmatmul.bf16.gmra.mxu0 %v1891
        %v1906 = vpop.f32.mrf.mxu0
        %v1907 = vadd.f32 0.0, %v1906
        %v1908 = vpop.f32.mrf.mxu0
        %1909 = vdwg.mxu0
        %v1911 = vsel %vm1750, %v1883, 0
        %v1914 = vsel %vm1893, %v1887, 0
        %1916 = vmatpush.bf16.msra.mxu0 0
        %1917 = vmatpush.bf16.msra.mxu0 0
        %1918 = vmatpush.bf16.msra.mxu0 0
        %1919 = vmatpush.bf16.msra.mxu0 0
        %1920 = vmatpush.bf16.msra.mxu0 0
        %1921 = vmatpush.bf16.msra.mxu0 0
        %1922 = vmatpush.bf16.msra.mxu0 0
        %1923 = vmatpush.bf16.msra.mxu0 %v1914
        %1924 = vmatmul.bf16.gmra.mxu0 %v1911
        %v1925 = vpop.f32.mrf.mxu0
        %v1926 = vadd.f32 0.0, %v1925
        %v1927 = vpop.f32.mrf.mxu0
        %1928 = vdwg.mxu0
        %v1930 = vsel %vm1750, %v1884, 0
        %v1933 = vsel %vm1893, %v1888, 0
        %1935 = vmatpush.bf16.msra.mxu0 0
        %1936 = vmatpush.bf16.msra.mxu0 0
        %1937 = vmatpush.bf16.msra.mxu0 0
        %1938 = vmatpush.bf16.msra.mxu0 0
        %1939 = vmatpush.bf16.msra.mxu0 0
        %1940 = vmatpush.bf16.msra.mxu0 0
        %1941 = vmatpush.bf16.msra.mxu0 0
        %1942 = vmatpush.bf16.msra.mxu0 %v1933
        %1943 = vmatmul.bf16.gmra.mxu0 %v1930
        %v1944 = vpop.f32.mrf.mxu0
        %v1945 = vadd.f32 0.0, %v1944
        %v1946 = vpop.f32.mrf.mxu0
        %1947 = vdwg.mxu0
        %v1949 = vsel %vm1750, %v1885, 0
        %v1952 = vsel %vm1893, %v1889, 0
        %1954 = vmatpush.bf16.msra.mxu0 0
        %1955 = vmatpush.bf16.msra.mxu0 0
        %1956 = vmatpush.bf16.msra.mxu0 0
        %1957 = vmatpush.bf16.msra.mxu0 0
        %1958 = vmatpush.bf16.msra.mxu0 0
        %1959 = vmatpush.bf16.msra.mxu0 0
        %1960 = vmatpush.bf16.msra.mxu0 0
        %1961 = vmatpush.bf16.msra.mxu0 %v1952
        %1962 = vmatmul.bf16.gmra.mxu0 %v1949
        %v1963 = vpop.f32.mrf.mxu0
        %v1964 = vadd.f32 0.0, %v1963
        %v1965 = vpop.f32.mrf.mxu0
        %1966 = vdwg.mxu0
        %v1967 = vpack.c.bf16 %v1907, %v1907
        %v1968 = vpack.c.bf16 %v1926, %v1926
        %v1969 = vpack.c.bf16 %v1945, %v1945
        %v1970 = vpack.c.bf16 %v1964, %v1964
        %v1971 = vld [vmem:[%s871] sm:$0xf]
        %v1972 = vld [vmem:[%s871 + $0x4] sm:$0xf]
        %v1973 = vld [vmem:[%s871 + $0x8] sm:$0xf]
        %v1974 = vld [vmem:[%s871 + $0xc] sm:$0xf]
        %v1976 = vsel %vm1750, %v1967, 0
        %v1979 = vsel %vm1893, %v1971, 0
        %1981 = vmatpush.bf16.msra.mxu0 0
        %1982 = vmatpush.bf16.msra.mxu0 0
        %1983 = vmatpush.bf16.msra.mxu0 0
        %1984 = vmatpush.bf16.msra.mxu0 0
        %1985 = vmatpush.bf16.msra.mxu0 0
        %1986 = vmatpush.bf16.msra.mxu0 0
        %1987 = vmatpush.bf16.msra.mxu0 0
        %1988 = vmatpush.bf16.msra.mxu0 %v1979
        %1989 = vmatmul.bf16.gmra.mxu0 %v1976
        %v1990 = vpop.f32.mrf.mxu0
        %v1991 = vadd.f32 0.0, %v1990
        %v1992 = vpop.f32.mrf.mxu0
        %1993 = vdwg.mxu0
        %v1995 = vsel %vm1750, %v1968, 0
        %v1998 = vsel %vm1893, %v1972, 0
        %2000 = vmatpush.bf16.msra.mxu0 0
        %2001 = vmatpush.bf16.msra.mxu0 0
        %2002 = vmatpush.bf16.msra.mxu0 0
        %2003 = vmatpush.bf16.msra.mxu0 0
        %2004 = vmatpush.bf16.msra.mxu0 0
        %2005 = vmatpush.bf16.msra.mxu0 0
        %2006 = vmatpush.bf16.msra.mxu0 0
        %2007 = vmatpush.bf16.msra.mxu0 %v1998
        %2008 = vmatmul.bf16.gmra.mxu0 %v1995
        %v2009 = vpop.f32.mrf.mxu0
        %v2010 = vadd.f32 0.0, %v2009
        %v2011 = vpop.f32.mrf.mxu0
        %2012 = vdwg.mxu0
        %v2014 = vsel %vm1750, %v1969, 0
        %v2017 = vsel %vm1893, %v1973, 0
        %2019 = vmatpush.bf16.msra.mxu0 0
        %2020 = vmatpush.bf16.msra.mxu0 0
        %2021 = vmatpush.bf16.msra.mxu0 0
        %2022 = vmatpush.bf16.msra.mxu0 0
        %2023 = vmatpush.bf16.msra.mxu0 0
        %2024 = vmatpush.bf16.msra.mxu0 0
        %2025 = vmatpush.bf16.msra.mxu0 0
        %2026 = vmatpush.bf16.msra.mxu0 %v2017
        %2027 = vmatmul.bf16.gmra.mxu0 %v2014
        %v2028 = vpop.f32.mrf.mxu0
        %v2029 = vadd.f32 0.0, %v2028
        %v2030 = vpop.f32.mrf.mxu0
        %2031 = vdwg.mxu0
        %v2033 = vsel %vm1750, %v1970, 0
        %v2036 = vsel %vm1893, %v1974, 0
        %2038 = vmatpush.bf16.msra.mxu0 0
        %2039 = vmatpush.bf16.msra.mxu0 0
        %2040 = vmatpush.bf16.msra.mxu0 0
        %2041 = vmatpush.bf16.msra.mxu0 0
        %2042 = vmatpush.bf16.msra.mxu0 0
        %2043 = vmatpush.bf16.msra.mxu0 0
        %2044 = vmatpush.bf16.msra.mxu0 0
        %2045 = vmatpush.bf16.msra.mxu0 %v2036
        %2046 = vmatmul.bf16.gmra.mxu0 %v2033
        %v2047 = vpop.f32.mrf.mxu0
        %v2048 = vadd.f32 0.0, %v2047
        %v2049 = vpop.f32.mrf.mxu0
        %2050 = vdwg.mxu0
        %v2051 = vsel %vm1538, %v1991, 0.0
        %v2052 = vsel %vm1538, %v2010, 0.0
        %v2053 = vadd.f32 %v2051, %v2052
        %v2054 = vsel %vm1538, %v2029, 0.0
        %v2055 = vadd.f32 %v2053, %v2054
        %v2056 = vsel %vm1538, %v2048, 0.0
        %v2057 = vadd.f32 %v2055, %v2056
        %v2058 = vld [vmem:[%s1070] sm:$0x1]
        %v2060 = vperm.slane %v2058, 0
        %v2062 = vadd.f32 %v2057, %v2060
        %v2063 = vadd.f32 %v2062, %v1532
        %v2064 = vld [vmem:[%s1077] sm:$0x1]
        %v2065 = vld [vmem:[%s1084] sm:$0x1]
        %v2066 = vsel %vm1538, %v2063, 0.0
        %2067 = vadd.xlane.f32.xlu0 %v2066
        %v2068 = vpop.xlane.xlu0 %2067
        %v2069 = vrcp.pop 32.0
        %v2070 = vmul.f32 32.0, %v2069
        %v2071 = vsub.f32 1.0, %v2070
        %v2072 = vmul.f32 %v2069, %v2071
        %v2073 = vadd.f32 %v2069, %v2072
        %vm2074 = vweird.f32 %v2069
        %v2075 = vsel %vm2074, %v2069, %v2073
        %v2076 = vmul.f32 %v2068, %v2075
        %v2077 = vsub.f32 %v2063, %v2076
        %v2078 = vmul.f32 %v2077, %v2077
        %v2079 = vsel %vm1538, %v2078, 0.0
        %2080 = vadd.xlane.f32.xlu0 %v2079
        %v2081 = vpop.xlane.xlu0 %2080
        %v2082 = vmul.f32 %v2081, %v2075
        %v2083 = vadd.f32 %v2082, 1e-06
        %v2084 = vrsqrt.pop %v2083
        %v2085 = vmul.f32 %v2084, %v2083
        %v2086 = vmul.f32 %v2085, %v2084
        %v2087 = vmul.f32 0.5, %v2086
        %v2088 = vsub.f32 1.5, %v2087
        %v2089 = vmul.f32 %v2084, %v2088
        %vm2090 = vweird.f32 %v2083
        %vm2091 = vweird.f32 %v2084
        %vm2092 = vmor %vm2090, %vm2091
        %v2093 = vsel %vm2092, %v2084, %v2089
        %v2094 = vmul.f32 %v2077, %v2093
        %v2096 = vperm.slane %v2064, 0
        %v2098 = vmul.f32 %v2094, %v2096
        %v2100 = vperm.slane %v2065, 0
        %v2102 = vadd.f32 %v2098, %v2100
        %2104 = vset.pattern.permute.xlu0 0
        %2105 = vperm.xlu0 %2104, %v1127
        %v2106 = vpop.permute.xlu0 %2105
        %v2108 = vmul.f32 %v2102, %v2106
        %v2109 = vpack.c.bf16 %v2108, %v2108
        %v2110 = vld [vmem:[%s881] sm:$0xf]
        %v2111 = vld [vmem:[%s881 + $0x4] sm:$0xf]
        %v2112 = vld [vmem:[%s881 + $0x8] sm:$0xf]
        %v2113 = vld [vmem:[%s881 + $0xc] sm:$0xf]
        %v2114 = vld [vmem:[%s1093] sm:$0x1]
        %v2116 = vperm.slane %v2114, 0
        %v2122 = vunpack.c.l.b16 %v2110
        %v2123 = vunpack.c.l.b16 %v2111
        %v2124 = vunpack.c.l.b16 %v2112
        %v2125 = vunpack.c.l.b16 %v2113
        %v2126 = vpack.c.b16 %v2123, %v2122
        %v2127 = vpack.c.b16 %v2125, %v2124
        %v2131 = vsel %vm1538, %v2109, 0
        %2133 = vmatpush.bf16.msra.mxu0 0
        %2134 = vmatpush.bf16.msra.mxu0 0
        %2135 = vmatpush.bf16.msra.mxu0 0
        %2136 = vmatpush.bf16.msra.mxu0 0
        %2137 = vmatpush.bf16.msra.mxu0 0
        %2138 = vmatpush.bf16.msra.mxu0 0
        %2139 = vmatpush.bf16.msra.mxu0 %v2127
        %2140 = vmatpush.bf16.msra.mxu0 %v2126
        %2141 = vmatmul.bf16.gmra.mxu0 %v2131
        %v2142 = vpop.f32.mrf.mxu0
        %v2143 = vadd.f32 %v2116, %v2142
        %v2144 = vpop.f32.mrf.mxu0
        %2145 = vdwg.mxu0
        %v2146 = vmul.f32 %v2143, 0.5
        %v2147 = vmul.f32 %v2143, 0.044715
        %v2148 = vmul.f32 %v2147, %v2143
        %v2149 = vmul.f32 %v2148, %v2143
        %v2150 = vadd.f32 %v2143, %v2149
        %v2151 = vmul.f32 %v2150, 0.7978846
        %v2152 = vtanh.pop %v2151
        %v2153 = vadd.f32 %v2152, 1.0
        %v2154 = vmul.f32 %v2146, %v2153
        %v2155 = vpack.c.bf16 %v2154, %v2154
        %v2156 = vld [vmem:[%s1102] sm:$0xf]
        %v2157 = vld [vmem:[%s1102 + $0x4] sm:$0xf]
        %v2158 = vld [vmem:[%s1102 + $0x8] sm:$0xf]
        %v2159 = vld [vmem:[%s1102 + $0xc] sm:$0xf]
        %v2160 = vld [vmem:[%s1102 + $0x10] sm:$0xf]
        %v2161 = vld [vmem:[%s1102 + $0x14] sm:$0xf]
        %v2162 = vld [vmem:[%s1102 + $0x18] sm:$0xf]
        %v2163 = vld [vmem:[%s1102 + $0x1c] sm:$0xf]
        %v2164 = vld [vmem:[%s1109] sm:$0x1]
        %v2166 = vperm.slane %v2164, 0
        %v2176 = vunpack.c.l.b16 %v2156
        %v2177 = vunpack.c.l.b16 %v2157
        %v2178 = vunpack.c.l.b16 %v2158
        %v2179 = vunpack.c.l.b16 %v2159
        %v2180 = vunpack.c.l.b16 %v2160
        %v2181 = vunpack.c.l.b16 %v2161
        %v2182 = vunpack.c.l.b16 %v2162
        %v2183 = vunpack.c.l.b16 %v2163
        %v2184 = vpack.c.b16 %v2177, %v2176
        %v2185 = vpack.c.b16 %v2179, %v2178
        %v2186 = vpack.c.b16 %v2181, %v2180
        %v2187 = vpack.c.b16 %v2183, %v2182
        %vm2192 = vcmask 523264
        %v2194 = vsel %vm2192, %v2155, 0
        %2196 = vmatpush.bf16.msra.mxu0 0
        %2197 = vmatpush.bf16.msra.mxu0 0
        %2198 = vmatpush.bf16.msra.mxu0 0
        %2199 = vmatpush.bf16.msra.mxu0 0
        %2200 = vmatpush.bf16.msra.mxu0 %v2187
        %2201 = vmatpush.bf16.msra.mxu0 %v2186
        %2202 = vmatpush.bf16.msra.mxu0 %v2185
        %2203 = vmatpush.bf16.msra.mxu0 %v2184
        %2204 = vmatmul.bf16.gmra.mxu0 %v2194
        %v2205 = vpop.f32.mrf.mxu0
        %v2206 = vadd.f32 %v2166, %v2205
        %v2207 = vpop.f32.mrf.mxu0
        %2208 = vdwg.mxu0
        %v2209 = vadd.f32 %v2206, %v2108
        %v2210 = vld [vmem:[%s1116] sm:$0x1]
        %v2211 = vld [vmem:[%s1123] sm:$0x1]
        %v2212 = vsel %vm1538, %v2209, 0.0
        %2213 = vadd.xlane.f32.xlu0 %v2212
        %v2214 = vpop.xlane.xlu0 %2213
        %v2215 = vmul.f32 %v2214, %v2075
        %v2216 = vsub.f32 %v2209, %v2215
        %v2217 = vmul.f32 %v2216, %v2216
        %v2218 = vsel %vm1538, %v2217, 0.0
        %2219 = vadd.xlane.f32.xlu0 %v2218
        %v2220 = vpop.xlane.xlu0 %2219
        %v2221 = vmul.f32 %v2220, %v2075
        %v2222 = vadd.f32 %v2221, 1e-06
        %v2223 = vrsqrt.pop %v2222
        %v2224 = vmul.f32 %v2223, %v2222
        %v2225 = vmul.f32 %v2224, %v2223
        %v2226 = vmul.f32 0.5, %v2225
        %v2227 = vsub.f32 1.5, %v2226
        %v2228 = vmul.f32 %v2223, %v2227
        %vm2229 = vweird.f32 %v2222
        %vm2230 = vweird.f32 %v2223
        %vm2231 = vmor %vm2229, %vm2230
        %v2232 = vsel %vm2231, %v2223, %v2228
        %v2233 = vmul.f32 %v2216, %v2232
        %v2235 = vperm.slane %v2210, 0
        %v2237 = vmul.f32 %v2233, %v2235
        %v2239 = vperm.slane %v2211, 0
        %v2241 = vadd.f32 %v2237, %v2239
        %v2242 = vmul.f32 %v2241, %v2106
        %2243 = vst.msk [vmem:[#allocation2] sm:$0xff] %vm1538, %v2242
        %p2244 = scmp.eq.s32.totalorder %s47, 1
        // Predicated region
        $region113: #{tpu_custom_call.1} parent=99 // pred_check
          %p2245 = pneg %p2244
        $region114: #{tpu_custom_call.1} parent=99 // pred_check_branch
          %2247 = sbr.rel (%p2245) target = $region116
        $region115: #{tpu_custom_call.1} parent=99 // pred_region
          %2248 = vst.msk [vmem:[%s1021] sm:$0xff] %vm1538, %v2242
        $region116: #{tpu_custom_call.1} parent=99 // pred_fallthru
          _
        %s2249 = sand.u32 %s626, 1
        %s2250 = scalar_lea.sflag [#allocation6], %s2249
        %s2251 = sand.u32 %s626, 1
        %s2252 = smul.addr %s2251, 8
        %s2253 = scalar_lea.vmem [#allocation9], %s2252
        // Predicated region
        $region117: #{tpu_custom_call.1} parent=99 // pred_check
          %p2254 = pneg %p636
        $region118: #{tpu_custom_call.1} parent=99 // pred_check_branch
          %2256 = sbr.rel (%p2254) target = $region120
        $region119: #{tpu_custom_call.1} parent=99 // pred_region
          %2258 = vsyncadd %s2250, 0
          %s2259 = smul.addr %s45, 2
          %s2260 = sadd.s32 %s46, %s2259
          %s2261 = smul.addr %s2260, 8
          %s2262 = scalar_lea.hbm %s20, %s2261
          %s2264 = sshll.u32 %s2253, 4
          %s2265 = int_to_ptr.vmem [resolvable:$true] %s2264
          %s2266 = sshll.u32 %s2262, 4
          %s2267 = int_to_ptr.hbm [resolvable:$true] %s2266
          %2269 = dma.vmem_to_hbm [thread:$0]  %s2265, 128, %s2267, %s2250
        $region120: #{tpu_custom_call.1} parent=99 // pred_fallthru
          _
      $region100: #{tpu_custom_call.1} parent=5 // pred_fallthru
        _
      %p2270 = scmp.le.s32.totalorder 2, %s35
      // Predicated region
      $region121: #{tpu_custom_call.1} parent=5 // pred_check
        %p2271 = pneg %p2270
      $region122: #{tpu_custom_call.1} parent=5 // pred_check_branch
        %2273 = sbr.rel (%p2271) target = $region124
      $region123: #{tpu_custom_call.1} parent=5 // pred_region
        %s2274 = ssub.s32 %s35, 2
        // Predicated region
        $region125: #{tpu_custom_call.1} parent=123 // pred_check
          %p2275 = pneg %p642
        $region126: #{tpu_custom_call.1} parent=123 // pred_check_branch
          %2277 = sbr.rel (%p2275) target = $region128
        $region127: #{tpu_custom_call.1} parent=123 // pred_region
          %s2278 = sand.u32 %s627, 1
          %s2279 = scalar_lea.sflag [#allocation6], %s2278
          %s2280 = sand.u32 %s627, 1
          %s2281 = smul.addr %s2280, 8
          %s2282 = scalar_lea.vmem [#allocation9], %s2281
          %2284 = dma.done %s2279, 128
        $region128: #{tpu_custom_call.1} parent=123 // pred_fallthru
          _
      $region124: #{tpu_custom_call.1} parent=5 // pred_fallthru
        _
    $region6: #{tpu_custom_call.1} parent=1 // loop_footer
      %s39 = sadd.s32 1, %s35
    $region7: #{tpu_custom_call.1} parent=1 // loop_footer_branch
      %34 = sbr.rel target = $region3
    $region8: #{tpu_custom_call.1} parent=1 // loop_exit
      _
    %2285 = vsyncpa [#allocation5], 1
    %s2286 = scalar_lea.sflag [#allocation5], 1
    %2287 = vsyncpa %s2286, 1
    %2288 = vsyncpa [#allocation8], 1
    %s2289 = scalar_lea.sflag [#allocation8], 1
    %2290 = vsyncpa %s2289, 1
    %2291 = vsyncpa [#allocation6], 1
    %s2292 = scalar_lea.sflag [#allocation6], 1
    %2293 = vsyncpa %s2292, 1

</llo_original>
